<compile_context>
chip_gen: v6e
topology: v6e:2x2x1
jax: 0.10.0
libtpu: 0.0.40
codegen_flags: <defaults>
</compile_context>

<pallas_src>
import functools
import math

import jax
import jax.numpy as jnp
from jax.experimental import pallas as pl
from jax.experimental.pallas import tpu as pltpu

# ----------------------------- config ---------------------------------------
DEIT_TAU = 1.0
DEIT_ALPHA = 0.5
CSKD_LOSS_WEIGHT = 1.0
CSKD_DECAY_FUNC = "linear"          # 'linear' | 'x2' | 'cos'
NUM_CLASSES = 128

_S = 49                              # 7x7 teacher / aligned-student spatial positions
_S_PAD = 56                          # padded to a multiple of 8 sublanes
_TB_MAX = 8                          # max images per grid step


def get_decay_ratio(epoch, max_epoch):
    x = epoch / max_epoch
    if CSKD_DECAY_FUNC == "linear":
        return 1.0 - x
    elif CSKD_DECAY_FUNC == "x2":
        return (1.0 - x) ** 2
    elif CSKD_DECAY_FUNC == "cos":
        return math.cos(math.pi * 0.5 * x)
    else:
        raise NotImplementedError(CSKD_DECAY_FUNC)


# ----------------------------- kernel helpers ---------------------------------
def _scale_by_inv_tau(v):
    # DEIT_TAU is a trace-time constant; with tau == 1.0 the scaling folds away.
    if DEIT_TAU != 1.0:
        return v * (1.0 / DEIT_TAU)
    return v


def _log_softmax(v):
    m = jnp.max(v, axis=-1, keepdims=True)
    return (v - m) - jnp.log(jnp.sum(jnp.exp(v - m), axis=-1, keepdims=True))


def _log_softmax_and_probs(v):
    # One exp pass; probabilities via an EUP reciprocal instead of a second exp.
    m = jnp.max(v, axis=-1, keepdims=True)
    e = jnp.exp(v - m)
    s = jnp.sum(e, axis=-1, keepdims=True)
    return (v - m) - jnp.log(s), e * pl.reciprocal(s, approx=True)


# ----------------------------- fused Pallas kernel ----------------------------
def _cskd_fused_kernel(decay, x_ref, stu_ref, deit_ref, outs_ref, lbl_ref, w_ref,
                       cskd_ref, deit_o_ref, ce_ref):
    """One grid step == TB images.  Writes three lane-dense partial blocks:
         cskd_ref  (TB,1,C): per-image per-class CSKD KL partial (summed over 49 rows)
         deit_o_ref(TB,1,C): per-image per-class DeiT KL partial
         ce_ref    (TB,1,1): per-image cross-entropy partial (lse - picked logit)
    """
    tb, s_pad, c = stu_ref.shape

    # ---- teacher 1x1 conv on the pooled inputs: one MXU dot for all TB images;
    #      the teacher logits stay resident in VMEM (never touch HBM). ----------
    x = x_ref[...].astype(jnp.float32)                      # (TB*S_PAD, CIN); pad rows 0
    w = w_ref[...].astype(jnp.float32)                      # (CIN, C)
    tea = jnp.dot(x, w, preferred_element_type=jnp.float32)  # (TB*S_PAD, C)
    tea = tea.reshape(tb, s_pad, c)                         # sublane-aligned split (56%8==0)
    # pad rows of x are zero (bias-free teacher) -> mean over the 49 real rows
    tea_global = jnp.sum(tea, axis=1, keepdims=True) * (1.0 / _S)   # (TB,1,C)

    # ---- loss_cskd: blended teacher vs aligned student, KL(sum, log_target) ----
    stu = stu_ref[...].astype(jnp.float32)                  # (TB,S_PAD,C); pad rows 0
    blend = decay * tea + (1.0 - decay) * tea_global        # (TB,1,C) broadcast
    ls = _log_softmax(_scale_by_inv_tau(stu))
    lt, pt = _log_softmax_and_probs(_scale_by_inv_tau(blend))
    kl = pt * (lt - ls)                                     # (TB,S_PAD,C)
    row = jax.lax.broadcasted_iota(jnp.int32, (1, s_pad, 1), 1)
    kl = jnp.where(row < _S, kl, 0.0)                       # mask the 7 spatial pad rows
    cskd_ref[...] = jnp.sum(kl, axis=1, keepdims=True)      # (TB,1,C)

    # ---- loss_deit: student deit logits vs teacher global logits ----
    sd = deit_ref[...].astype(jnp.float32)                  # (TB,1,C)
    lsd = _log_softmax(_scale_by_inv_tau(sd))
    ltg, ptg = _log_softmax_and_probs(_scale_by_inv_tau(tea_global))
    deit_o_ref[...] = ptg * (ltg - lsd)                     # (TB,1,C)

    # ---- loss_base: cross entropy on the classifier head ----
    xo = outs_ref[...].astype(jnp.float32)                  # (TB,1,C)
    m = jnp.max(xo, axis=-1, keepdims=True)
    lse = jnp.log(jnp.sum(jnp.exp(xo - m), axis=-1, keepdims=True)) + m   # (TB,1,1)
    lbl = lbl_ref[...]                                      # (TB,1,1) int32
    col = jax.lax.broadcasted_iota(jnp.int32, (1, 1, c), 2)
    picked = jnp.sum(jnp.where(col == lbl, xo, 0.0), axis=-1, keepdims=True)
    ce_ref[...] = lse - picked                              # (TB,1,1)


# ----------------------------- JAX glue (forward) -----------------------------
def cskd_loss_forward(inputs, outputs_tuple, labels, epoch, max_epoch, teacher_w):
    """inputs: NCHW images; outputs_tuple = (outputs, stu_deit_logits, stu_dense_logits)."""
    outputs, stu_deit_logits, stu_dense_logits = outputs_tuple
    n, c = outputs.shape
    cin = inputs.shape[1]
    decay = float(get_decay_ratio(epoch, max_epoch))

    # Images per grid step: amortize the ~0.35us/step pipeline overhead, but keep
    # the grid length >= 2 so ("parallel",) still splits the batch across both
    # TensorCores on v7x.
    tb = max(1, min(_TB_MAX, pl.cdiv(n, 2)))
    g = pl.cdiv(n, tb)
    n_pad = g * tb
    pad = n_pad - n

    # Teacher input: 2x2 avg pool of the 14x14 grid, channel-last rows (lane dim),
    # padded 49->56 spatial rows and N->n_pad images (all pad rows are zero), then
    # flattened so the kernel does one (TB*56, CIN) @ (CIN, C) MXU dot per step.
    x_nhwc = inputs.transpose(0, 2, 3, 1)                                  # (N,14,14,CIN)
    x_rows = x_nhwc.reshape(n, 7, 2, 7, 2, cin).mean(axis=(2, 4)).reshape(n, _S, cin)
    x_rows = jnp.pad(x_rows, ((0, pad), (0, _S_PAD - _S), (0, 0)))
    x_flat = x_rows.reshape(n_pad * _S_PAD, cin)

    # Aligned student dense logits: 14x14 -> 7x7 avg pool, channel-last throughout
    # (class dim stays in lanes -> no relayout), pad rows / pad images are zero.
    # TODO(synk): fold this pool into the kernel with strided sublane loads of the
    # raw (N,196,C) logits if the pooled intermediate becomes the HBM bottleneck.
    stu_rows = stu_dense_logits.reshape(n, 7, 2, 7, 2, c).mean(axis=(2, 4))
    stu_rows = jnp.pad(stu_rows.reshape(n, _S, c), ((0, pad), (0, _S_PAD - _S), (0, 0)))

    deit_rows = jnp.pad(stu_deit_logits, ((0, pad), (0, 0))).reshape(n_pad, 1, c)
    outs_rows = jnp.pad(outputs, ((0, pad), (0, 0))).reshape(n_pad, 1, c)
    # TODO(synk): no ignore_index handling — labels are assumed valid in [0, C).
    lbl_rows = jnp.pad(labels.astype(jnp.int32), ((0, pad),)).reshape(n_pad, 1, 1)

    kernel = functools.partial(_cskd_fused_kernel, decay)
    grid_spec = pltpu.PrefetchScalarGridSpec(
        num_scalar_prefetch=0,
        grid=(g,),
        in_specs=[
            pl.BlockSpec((tb * _S_PAD, cin), lambda i: (i, 0)),     # pooled inputs (flat)
            pl.BlockSpec((tb, _S_PAD, c), lambda i: (i, 0, 0)),     # pooled student logits
            pl.BlockSpec((tb, 1, c), lambda i: (i, 0, 0)),          # deit logits
            pl.BlockSpec((tb, 1, c), lambda i: (i, 0, 0)),          # classifier outputs
            pl.BlockSpec((tb, 1, 1), lambda i: (i, 0, 0)),          # labels (int32)
            pl.BlockSpec((cin, c), lambda i: (0, 0)),               # teacher weight
        ],
        out_specs=[
            pl.BlockSpec((tb, 1, c), lambda i: (i, 0, 0)),          # CSKD per-class partial
            pl.BlockSpec((tb, 1, c), lambda i: (i, 0, 0)),          # DeiT per-class partial
            pl.BlockSpec((tb, 1, 1), lambda i: (i, 0, 0)),          # CE per-image partial
        ],
    )
    cskd_part, deit_part, ce_part = pl.pallas_call(
        kernel,
        out_shape=(
            jax.ShapeDtypeStruct((n_pad, 1, c), jnp.float32),
            jax.ShapeDtypeStruct((n_pad, 1, c), jnp.float32),
            jax.ShapeDtypeStruct((n_pad, 1, 1), jnp.float32),
        ),
        grid_spec=grid_spec,
        compiler_params=pltpu.CompilerParams(
            dimension_semantics=("parallel",),          # v7x: both TCs split the batch
            vmem_limit_bytes=32 * 1024 * 1024),
    )(x_flat, stu_rows, deit_rows, outs_rows, lbl_rows, teacher_w)

    # Tail (batch-pad) images are dropped here; their rows are never summed.
    kl_cskd = jnp.sum(cskd_part[:n])
    kl_deit = jnp.sum(deit_part[:n])
    ce_sum = jnp.sum(ce_part[:n])

    t2 = DEIT_TAU * DEIT_TAU
    loss_base = ce_sum / float(n)
    loss_deit = kl_deit * t2 / float(stu_deit_logits.size)
    # Reference divides by size(0) of the *aligned* student logits == batch size N.
    loss_cskd = kl_cskd * t2 / float(n)

    alpha = DEIT_ALPHA
    return (loss_base * (1.0 - alpha)
            + loss_deit * alpha
            + loss_cskd * CSKD_LOSS_WEIGHT)


# ----------------------------- pure-JAX reference -----------------------------
def _reference_loss(inputs, outputs_tuple, labels, epoch, max_epoch, teacher_w):
    outputs, stu_deit_logits, stu_dense_logits = outputs_tuple
    n, c = outputs.shape
    cin = inputs.shape[1]
    T = DEIT_TAU
    decay = get_decay_ratio(epoch, max_epoch)

    lse = jax.nn.logsumexp(outputs, axis=-1)
    picked = jnp.take_along_axis(outputs, labels.astype(jnp.int32)[:, None], axis=-1)[:, 0]
    loss_base = jnp.mean(lse - picked)

    x = inputs.transpose(0, 2, 3, 1).reshape(n, 7, 2, 7, 2, cin)
    x = x.mean(axis=(2, 4)).reshape(n, _S, cin)
    tea_dense = jnp.einsum("nsk,kc->nsc", x, teacher_w)
    tea_global = tea_dense.mean(axis=1)

    lsd = jax.nn.log_softmax(stu_deit_logits / T, axis=-1)
    ltg = jax.nn.log_softmax(tea_global / T, axis=-1)
    loss_deit = jnp.sum(jnp.exp(ltg) * (ltg - lsd)) * T * T / stu_deit_logits.size

    stu_p = stu_dense_logits.reshape(n, 7, 2, 7, 2, c).mean(axis=(2, 4)).reshape(n, _S, c)
    tea_blend = decay * tea_dense + (1.0 - decay) * tea_global[:, None, :]
    ls = jax.nn.log_softmax(stu_p / T, axis=-1)
    lt = jax.nn.log_softmax(tea_blend / T, axis=-1)
    loss_cskd = jnp.sum(jnp.exp(lt) * (lt - ls)) * T * T / n

    alpha = DEIT_ALPHA
    return (loss_base * (1.0 - alpha) + loss_deit * alpha
            + loss_cskd * CSKD_LOSS_WEIGHT)


# ----------------------------- main ------------------------------------------
if __name__ == "__main__":
    key = jax.random.PRNGKey(0)
    k1, k2, k3, k4, k5, k6 = jax.random.split(key, 6)

    # N=5 exercises both the per-step batching (grid of 2 steps, TB=3) and the
    # tail-image padding path (n_pad=6, one zero-padded image sliced away).
    N, CIN, H, W = 5, 8, 14, 14          # inputs NCHW (PyTorch convention)
    C = NUM_CLASSES                      # 128 classes (lane-aligned)
    M = 14 * 14                          # 196 student patch tokens

    inputs = jax.random.normal(k1, (N, CIN, H, W), jnp.float32)
    outputs = jax.random.normal(k2, (N, C), jnp.float32)
    stu_deit_logits = jax.random.normal(k3, (N, C), jnp.float32)
    stu_dense_logits = jax.random.normal(k4, (N, M, C), jnp.float32)
    labels = jax.random.randint(k5, (N,), 0, C, jnp.int32)
    # synthetic teacher head weight (Cin -> C), deterministic, bias-free
    teacher_w = 0.1 * jax.random.normal(k6, (CIN, C), jnp.float32)

    loss = cskd_loss_forward(
        inputs,
        (outputs, stu_deit_logits, stu_dense_logits),
        labels,
        epoch=3,
        max_epoch=10,
        teacher_w=teacher_w,
    )
    loss = jax.block_until_ready(loss)
    assert loss.shape == () and jnp.isfinite(loss)

    ref = jax.block_until_ready(_reference_loss(
        inputs, (outputs, stu_deit_logits, stu_dense_logits), labels,
        epoch=3, max_epoch=10, teacher_w=teacher_w))
    # tolerance accounts for the approx EUP reciprocal in the in-kernel softmax
    assert jnp.allclose(loss, ref, rtol=2e-3, atol=2e-3), (loss, ref)

    print("KERNEL_OK")
</pallas_src>

<mosaic_0001>
module attributes {stable_mosaic.version = 11 : i64} {
  func.func @_cskd_fused_kernel(%arg0: i32, %arg1: memref<168x8xf32, #tpu.memory_space<vmem>>, %arg2: memref<3x56x128xf32, #tpu.memory_space<vmem>>, %arg3: memref<3x1x128xf32, #tpu.memory_space<vmem>>, %arg4: memref<3x1x128xf32, #tpu.memory_space<vmem>>, %arg5: memref<3x1x1xi32, #tpu.memory_space<vmem>>, %arg6: memref<8x128xf32, #tpu.memory_space<vmem>>, %arg7: memref<3x1x128xf32, #tpu.memory_space<vmem>>, %arg8: memref<3x1x128xf32, #tpu.memory_space<vmem>>, %arg9: memref<3x1x1xf32, #tpu.memory_space<vmem>>) attributes {dimension_semantics = [#tpu.dimension_semantics<parallel>], iteration_bounds = array<i64: 2>, scalar_prefetch = 0 : i64, scratch_operands = 0 : i64, tpu.core_type = #tpu.core_type<tc>, window_params = [{transform_indices = @transform_0, window_bounds = array<i64: 168, 8>}, {transform_indices = @transform_1, window_bounds = array<i64: 3, 56, 128>}, {transform_indices = @transform_2, window_bounds = array<i64: 3, 1, 128>}, {transform_indices = @transform_3, window_bounds = array<i64: 3, 1, 128>}, {transform_indices = @transform_4, window_bounds = array<i64: 3, 1, 1>}, {pipeline_mode = #tpu.pipeline_mode<synchronous>, transform_indices = @transform_5, window_bounds = array<i64: 8, 128>}, {transform_indices = @transform_6, window_bounds = array<i64: 3, 1, 128>}, {transform_indices = @transform_7, window_bounds = array<i64: 3, 1, 128>}, {transform_indices = @transform_8, window_bounds = array<i64: 3, 1, 1>}]} {
    %c0 = arith.constant 0 : index
    %c0_0 = arith.constant 0 : index
    %0 = vector.load %arg1[%c0, %c0_0] : memref<168x8xf32, #tpu.memory_space<vmem>>, vector<168x8xf32>
    %c0_1 = arith.constant 0 : index
    %c0_2 = arith.constant 0 : index
    %1 = vector.load %arg6[%c0_1, %c0_2] : memref<8x128xf32, #tpu.memory_space<vmem>>, vector<8x128xf32>
    %cst = arith.constant dense<0.000000e+00> : vector<168x128xf32>
    %2 = tpu.matmul %0, %1, %cst {dimension_numbers = #tpu.dot_dimension_numbers<[1], [0], [0], [1], [0, 0, 1, 1], [], []>} : vector<168x8xf32>, vector<8x128xf32>, vector<168x128xf32> -> vector<168x128xf32>
    %3 = vector.shape_cast %2 : vector<168x128xf32> to vector<3x56x128xf32>
    %cst_3 = arith.constant dense<0.000000e+00> : vector<3x128xf32>
    %4 = vector.multi_reduction <add>, %3, %cst_3 [1] : vector<3x56x128xf32> to vector<3x128xf32>
    %5 = vector.shape_cast %4 : vector<3x128xf32> to vector<3x1x128xf32>
    %cst_4 = arith.constant 0.0204081628 : f32
    %6 = vector.broadcast %cst_4 : f32 to vector<3x1x128xf32>
    %7 = arith.mulf %5, %6 : vector<3x1x128xf32>
    %c0_5 = arith.constant 0 : index
    %c0_6 = arith.constant 0 : index
    %c0_7 = arith.constant 0 : index
    %8 = vector.load %arg2[%c0_5, %c0_6, %c0_7] : memref<3x56x128xf32, #tpu.memory_space<vmem>>, vector<3x56x128xf32>
    %cst_8 = arith.constant 0.699999988 : f32
    %9 = vector.broadcast %cst_8 : f32 to vector<3x56x128xf32>
    %10 = arith.mulf %9, %3 : vector<3x56x128xf32>
    %cst_9 = arith.constant 3.000000e-01 : f32
    %11 = vector.broadcast %cst_9 : f32 to vector<3x1x128xf32>
    %12 = arith.mulf %11, %7 : vector<3x1x128xf32>
    %13 = vector.broadcast %12 : vector<3x1x128xf32> to vector<3x56x128xf32>
    %14 = arith.addf %10, %13 : vector<3x56x128xf32>
    %cst_10 = arith.constant dense<0xFF800000> : vector<3x56xf32>
    %15 = vector.multi_reduction <maximumf>, %8, %cst_10 [2] : vector<3x56x128xf32> to vector<3x56xf32>
    %16 = vector.shape_cast %15 : vector<3x56xf32> to vector<3x56x1xf32>
    %17 = vector.broadcast %16 : vector<3x56x1xf32> to vector<3x56x128xf32>
    %18 = arith.subf %8, %17 : vector<3x56x128xf32>
    %19 = vector.broadcast %16 : vector<3x56x1xf32> to vector<3x56x128xf32>
    %20 = arith.subf %8, %19 : vector<3x56x128xf32>
    %21 = math.exp %20 : vector<3x56x128xf32>
    %cst_11 = arith.constant dense<0.000000e+00> : vector<3x56xf32>
    %22 = vector.multi_reduction <add>, %21, %cst_11 [2] : vector<3x56x128xf32> to vector<3x56xf32>
    %23 = vector.shape_cast %22 : vector<3x56xf32> to vector<3x56x1xf32>
    %24 = math.log %23 : vector<3x56x1xf32>
    %25 = vector.broadcast %24 : vector<3x56x1xf32> to vector<3x56x128xf32>
    %26 = arith.subf %18, %25 : vector<3x56x128xf32>
    %cst_12 = arith.constant dense<0xFF800000> : vector<3x56xf32>
    %27 = vector.multi_reduction <maximumf>, %14, %cst_12 [2] : vector<3x56x128xf32> to vector<3x56xf32>
    %28 = vector.shape_cast %27 : vector<3x56xf32> to vector<3x56x1xf32>
    %29 = vector.broadcast %28 : vector<3x56x1xf32> to vector<3x56x128xf32>
    %30 = arith.subf %14, %29 : vector<3x56x128xf32>
    %31 = math.exp %30 : vector<3x56x128xf32>
    %cst_13 = arith.constant dense<0.000000e+00> : vector<3x56xf32>
    %32 = vector.multi_reduction <add>, %31, %cst_13 [2] : vector<3x56x128xf32> to vector<3x56xf32>
    %33 = vector.shape_cast %32 : vector<3x56xf32> to vector<3x56x1xf32>
    %34 = vector.broadcast %28 : vector<3x56x1xf32> to vector<3x56x128xf32>
    %35 = arith.subf %14, %34 : vector<3x56x128xf32>
    %36 = math.log %33 : vector<3x56x1xf32>
    %37 = vector.broadcast %36 : vector<3x56x1xf32> to vector<3x56x128xf32>
    %38 = arith.subf %35, %37 : vector<3x56x128xf32>
    %39 = tpu.reciprocal %33 {approx = true} : vector<3x56x1xf32> -> vector<3x56x1xf32>
    %40 = vector.broadcast %39 : vector<3x56x1xf32> to vector<3x56x128xf32>
    %41 = arith.mulf %31, %40 : vector<3x56x128xf32>
    %42 = arith.subf %38, %26 : vector<3x56x128xf32>
    %43 = arith.mulf %41, %42 : vector<3x56x128xf32>
    %44 = tpu.iota {dimensions = array<i32: 1>} : vector<1x56x1xi32>
    %c49_i32 = arith.constant 49 : i32
    %45 = vector.broadcast %c49_i32 : i32 to vector<1x56x1xi32>
    %46 = arith.cmpi slt, %44, %45 : vector<1x56x1xi32>
    %cst_14 = arith.constant 0.000000e+00 : f32
    %47 = vector.shape_cast %46 : vector<1x56x1xi1> to vector<1x56x1xi1>
    %48 = vector.broadcast %47 : vector<1x56x1xi1> to vector<3x56x128xi1>
    %49 = vector.broadcast %cst_14 : f32 to vector<3x56x128xf32>
    %50 = arith.select %48, %43, %49 : vector<3x56x128xi1>, vector<3x56x128xf32>
    %cst_15 = arith.constant dense<0.000000e+00> : vector<3x128xf32>
    %51 = vector.multi_reduction <add>, %50, %cst_15 [1] : vector<3x56x128xf32> to vector<3x128xf32>
    %52 = vector.shape_cast %51 : vector<3x128xf32> to vector<3x1x128xf32>
    %c0_16 = arith.constant 0 : index
    %c0_17 = arith.constant 0 : index
    %c0_18 = arith.constant 0 : index
    %53 = vector.load %arg7[%c0_16, %c0_17, %c0_18] : memref<3x1x128xf32, #tpu.memory_space<vmem>>, vector<3x1x128xf32>
    tpu.vector_store %arg7[%c0_16, %c0_17, %c0_18], %52 {strides = array<i32>} : memref<3x1x128xf32, #tpu.memory_space<vmem>>, vector<3x1x128xf32>,
    %c0_19 = arith.constant 0 : index
    %c0_20 = arith.constant 0 : index
    %c0_21 = arith.constant 0 : index
    %54 = vector.load %arg3[%c0_19, %c0_20, %c0_21] : memref<3x1x128xf32, #tpu.memory_space<vmem>>, vector<3x1x128xf32>
    %cst_22 = arith.constant dense<0xFF800000> : vector<3x1xf32>
    %55 = vector.multi_reduction <maximumf>, %54, %cst_22 [2] : vector<3x1x128xf32> to vector<3x1xf32>
    %56 = vector.shape_cast %55 : vector<3x1xf32> to vector<3x1x1xf32>
    %57 = vector.broadcast %56 : vector<3x1x1xf32> to vector<3x1x128xf32>
    %58 = arith.subf %54, %57 : vector<3x1x128xf32>
    %59 = vector.broadcast %56 : vector<3x1x1xf32> to vector<3x1x128xf32>
    %60 = arith.subf %54, %59 : vector<3x1x128xf32>
    %61 = math.exp %60 : vector<3x1x128xf32>
    %cst_23 = arith.constant dense<0.000000e+00> : vector<3x1xf32>
    %62 = vector.multi_reduction <add>, %61, %cst_23 [2] : vector<3x1x128xf32> to vector<3x1xf32>
    %63 = vector.shape_cast %62 : vector<3x1xf32> to vector<3x1x1xf32>
    %64 = math.log %63 : vector<3x1x1xf32>
    %65 = vector.broadcast %64 : vector<3x1x1xf32> to vector<3x1x128xf32>
    %66 = arith.subf %58, %65 : vector<3x1x128xf32>
    %cst_24 = arith.constant dense<0xFF800000> : vector<3x1xf32>
    %67 = vector.multi_reduction <maximumf>, %7, %cst_24 [2] : vector<3x1x128xf32> to vector<3x1xf32>
    %68 = vector.shape_cast %67 : vector<3x1xf32> to vector<3x1x1xf32>
    %69 = vector.broadcast %68 : vector<3x1x1xf32> to vector<3x1x128xf32>
    %70 = arith.subf %7, %69 : vector<3x1x128xf32>
    %71 = math.exp %70 : vector<3x1x128xf32>
    %cst_25 = arith.constant dense<0.000000e+00> : vector<3x1xf32>
    %72 = vector.multi_reduction <add>, %71, %cst_25 [2] : vector<3x1x128xf32> to vector<3x1xf32>
    %73 = vector.shape_cast %72 : vector<3x1xf32> to vector<3x1x1xf32>
    %74 = vector.broadcast %68 : vector<3x1x1xf32> to vector<3x1x128xf32>
    %75 = arith.subf %7, %74 : vector<3x1x128xf32>
    %76 = math.log %73 : vector<3x1x1xf32>
    %77 = vector.broadcast %76 : vector<3x1x1xf32> to vector<3x1x128xf32>
    %78 = arith.subf %75, %77 : vector<3x1x128xf32>
    %79 = tpu.reciprocal %73 {approx = true} : vector<3x1x1xf32> -> vector<3x1x1xf32>
    %80 = vector.broadcast %79 : vector<3x1x1xf32> to vector<3x1x128xf32>
    %81 = arith.mulf %71, %80 : vector<3x1x128xf32>
    %82 = arith.subf %78, %66 : vector<3x1x128xf32>
    %83 = arith.mulf %81, %82 : vector<3x1x128xf32>
    %c0_26 = arith.constant 0 : index
    %c0_27 = arith.constant 0 : index
    %c0_28 = arith.constant 0 : index
    %84 = vector.load %arg8[%c0_26, %c0_27, %c0_28] : memref<3x1x128xf32, #tpu.memory_space<vmem>>, vector<3x1x128xf32>
    tpu.vector_store %arg8[%c0_26, %c0_27, %c0_28], %83 {strides = array<i32>} : memref<3x1x128xf32, #tpu.memory_space<vmem>>, vector<3x1x128xf32>,
    %c0_29 = arith.constant 0 : index
    %c0_30 = arith.constant 0 : index
    %c0_31 = arith.constant 0 : index
    %85 = vector.load %arg4[%c0_29, %c0_30, %c0_31] : memref<3x1x128xf32, #tpu.memory_space<vmem>>, vector<3x1x128xf32>
    %cst_32 = arith.constant dense<0xFF800000> : vector<3x1xf32>
    %86 = vector.multi_reduction <maximumf>, %85, %cst_32 [2] : vector<3x1x128xf32> to vector<3x1xf32>
    %87 = vector.shape_cast %86 : vector<3x1xf32> to vector<3x1x1xf32>
    %88 = vector.broadcast %87 : vector<3x1x1xf32> to vector<3x1x128xf32>
    %89 = arith.subf %85, %88 : vector<3x1x128xf32>
    %90 = math.exp %89 : vector<3x1x128xf32>
    %cst_33 = arith.constant dense<0.000000e+00> : vector<3x1xf32>
    %91 = vector.multi_reduction <add>, %90, %cst_33 [2] : vector<3x1x128xf32> to vector<3x1xf32>
    %92 = vector.shape_cast %91 : vector<3x1xf32> to vector<3x1x1xf32>
    %93 = math.log %92 : vector<3x1x1xf32>
    %94 = arith.addf %93, %87 : vector<3x1x1xf32>
    %c0_34 = arith.constant 0 : index
    %c0_35 = arith.constant 0 : index
    %c0_36 = arith.constant 0 : index
    %95 = vector.load %arg5[%c0_34, %c0_35, %c0_36] : memref<3x1x1xi32, #tpu.memory_space<vmem>>, vector<3x1x1xi32>
    %96 = tpu.iota {dimensions = array<i32: 2>} : vector<1x1x128xi32>
    %97 = vector.broadcast %96 : vector<1x1x128xi32> to vector<3x1x128xi32>
    %98 = vector.broadcast %95 : vector<3x1x1xi32> to vector<3x1x128xi32>
    %99 = arith.cmpi eq, %97, %98 : vector<3x1x128xi32>
    %cst_37 = arith.constant 0.000000e+00 : f32
    %100 = vector.broadcast %cst_37 : f32 to vector<3x1x128xf32>
    %101 = arith.select %99, %85, %100 : vector<3x1x128xi1>, vector<3x1x128xf32>
    %cst_38 = arith.constant dense<0.000000e+00> : vector<3x1xf32>
    %102 = vector.multi_reduction <add>, %101, %cst_38 [2] : vector<3x1x128xf32> to vector<3x1xf32>
    %103 = vector.shape_cast %102 : vector<3x1xf32> to vector<3x1x1xf32>
    %104 = arith.subf %94, %103 : vector<3x1x1xf32>
    %c0_39 = arith.constant 0 : index
    %c0_40 = arith.constant 0 : index
    %c0_41 = arith.constant 0 : index
    %105 = vector.load %arg9[%c0_39, %c0_40, %c0_41] : memref<3x1x1xf32, #tpu.memory_space<vmem>>, vector<3x1x1xf32>
    tpu.vector_store %arg9[%c0_39, %c0_40, %c0_41], %104 {strides = array<i32>} : memref<3x1x1xf32, #tpu.memory_space<vmem>>, vector<3x1x1xf32>,
    return
  }
  func.func @transform_0(%arg0: i32) -> (i32, i32) {
    %c0_i32 = arith.constant 0 : i32
    %c0_i32_0 = arith.constant 0 : i32
    return %arg0, %c0_i32 : i32, i32
  }
  func.func @transform_1(%arg0: i32) -> (i32, i32, i32) {
    %c0_i32 = arith.constant 0 : i32
    %c0_i32_0 = arith.constant 0 : i32
    %c0_i32_1 = arith.constant 0 : i32
    return %arg0, %c0_i32, %c0_i32_0 : i32, i32, i32
  }
  func.func @transform_2(%arg0: i32) -> (i32, i32, i32) {
    %c0_i32 = arith.constant 0 : i32
    %c0_i32_0 = arith.constant 0 : i32
    %c0_i32_1 = arith.constant 0 : i32
    return %arg0, %c0_i32, %c0_i32_0 : i32, i32, i32
  }
  func.func @transform_3(%arg0: i32) -> (i32, i32, i32) {
    %c0_i32 = arith.constant 0 : i32
    %c0_i32_0 = arith.constant 0 : i32
    %c0_i32_1 = arith.constant 0 : i32
    return %arg0, %c0_i32, %c0_i32_0 : i32, i32, i32
  }
  func.func @transform_4(%arg0: i32) -> (i32, i32, i32) {
    %c0_i32 = arith.constant 0 : i32
    %c0_i32_0 = arith.constant 0 : i32
    %c0_i32_1 = arith.constant 0 : i32
    return %arg0, %c0_i32, %c0_i32_0 : i32, i32, i32
  }
  func.func @transform_5(%arg0: i32) -> (i32, i32) {
    %c0_i32 = arith.constant 0 : i32
    %c0_i32_0 = arith.constant 0 : i32
    %c0_i32_1 = arith.constant 0 : i32
    return %c0_i32, %c0_i32_0 : i32, i32
  }
  func.func @transform_6(%arg0: i32) -> (i32, i32, i32) {
    %c0_i32 = arith.constant 0 : i32
    %c0_i32_0 = arith.constant 0 : i32
    %c0_i32_1 = arith.constant 0 : i32
    return %arg0, %c0_i32, %c0_i32_0 : i32, i32, i32
  }
  func.func @transform_7(%arg0: i32) -> (i32, i32, i32) {
    %c0_i32 = arith.constant 0 : i32
    %c0_i32_0 = arith.constant 0 : i32
    %c0_i32_1 = arith.constant 0 : i32
    return %arg0, %c0_i32, %c0_i32_0 : i32, i32, i32
  }
  func.func @transform_8(%arg0: i32) -> (i32, i32, i32) {
    %c0_i32 = arith.constant 0 : i32
    %c0_i32_0 = arith.constant 0 : i32
    %c0_i32_1 = arith.constant 0 : i32
    return %arg0, %c0_i32, %c0_i32_0 : i32, i32, i32
  }
}

</mosaic_0001>

<llo_original>
// kernel: tpu_custom_call.1
$region0: #{tpu_custom_call.1}
  #allocation0 [shape = 'u32[]', space=smem, size = 0x4, offset = 0x4, fixed_abs, tag = 'smem constant byte address 0x4 - core index']
  #allocation1 [shape = 'u32[144,128]{1,0:T(1,128)}', space=vmem, size = 0x12000, scoped, tag = 'internal scratch']
  %s0 = inlined_call_operand.vmem [shape: f32[336,8], index: 0, kind: input, shape index: {}]
  %s1 = inlined_call_operand.vmem [shape: f32[6,56,128], index: 1, kind: input, shape index: {}]
  %s2 = inlined_call_operand.vmem [shape: f32[6,1,128], index: 2, kind: input, shape index: {}]
  %s3 = inlined_call_operand.vmem [shape: f32[6,1,128], index: 3, kind: input, shape index: {}]
  %s4 = inlined_call_operand.vmem [shape: s32[6,1,1], index: 4, kind: input, shape index: {}]
  %s5 = inlined_call_operand.vmem [shape: f32[8,128], index: 5, kind: input, shape index: {}]
  %s6 = inlined_call_operand.hbm [shape: f32[6,1,128], index: 6, kind: output, shape index: {0}]
  %s7 = inlined_call_operand.hbm [shape: f32[6,1,128], index: 7, kind: output, shape index: {1}]
  %s8 = inlined_call_operand.vmem [shape: f32[6,1,1], index: 8, kind: output, shape index: {2}]
  %9 = xla_tuple %s6, %s7, %s8
  %s10 = sld [smem:[#allocation0]]
  $region73: #{tpu_custom_call.1} parent=0
    _
  %s12 = ssub.s32 1, %s10
  %s13 = scalar_select 0, %s12, %s10
  $region1: #{tpu_custom_call.1} parent=0
    #allocation2 [shape = 'u8[3072]{0}', space=vmem, size = 0xc00, scoped, tag = 'output window, operand 0']
    #allocation3 [shape = 's32[2]{0}', space=sflag, size = 0x8, scoped, tag = 'scoped memory for tpu_custom_call.1']
    #allocation4 [shape = 'u8[3072]{0}', space=vmem, size = 0xc00, scoped, tag = 'output window, operand 1']
    #allocation5 [shape = 's32[2]{0}', space=sflag, size = 0x8, scoped, tag = 'scoped memory for tpu_custom_call.1']
    %14 = vsyncpa [#allocation3], 0
    %s15 = scalar_lea.sflag [#allocation3], 1
    %16 = vsyncpa %s15, 0
    %17 = vsyncpa [#allocation5], 0
    %s18 = scalar_lea.sflag [#allocation5], 1
    %19 = vsyncpa %s18, 0
    loop: start=0, step=1, limit=4
    $region2: #{tpu_custom_call.1} parent=1 // loop_pre_header
      _
    $region3: #{tpu_custom_call.1} parent=1 // loop_header
      %s21 = sphi 0, %s25
      %p22 = scmp.ge.s32.totalorder %s21, 4
      %s31 = sphi 0, %s33
      %s34 = sphi 0, %s31
      %s35 = sphi 0, %s34
      %s51 = sphi 0, %s35
      %s57 = sphi 0, %s59
      %s60 = sphi 0, %s57
      %s61 = sphi 0, %s60
      %s77 = sphi 0, %s61
      %s83 = sphi 0, %s85
      %s86 = sphi 0, %s83
      %s87 = sphi 0, %s86
      %s103 = sphi 0, %s87
      %s109 = sphi 0, %s111
      %s112 = sphi 0, %s109
      %s113 = sphi 0, %s112
      %s129 = sphi 0, %s113
      %s135 = sphi 0, %s137
      %s138 = sphi 0, %s135
      %s139 = sphi 0, %s138
      %s155 = sphi 0, %s139
      %s159 = sphi 0, %s159
      %s161 = sphi 0, %s159
      %s162 = sphi 0, %s161
      %s176 = sphi 0, %s162
      %s182 = sphi 0, %s184
      %s185 = sphi 0, %s182
      %s186 = sphi 0, %s185
      %s202 = sphi 0, %s186
      %s208 = sphi 0, %s210
      %s211 = sphi 0, %s208
      %s212 = sphi 0, %s211
      %s228 = sphi 0, %s212
      %s234 = sphi 0, %s236
      %s237 = sphi 0, %s234
      %s238 = sphi 0, %s237
      %s254 = sphi 0, %s238
    $region4: #{tpu_custom_call.1} parent=1 // loop_header_branch
      %24 = sbr.rel (%p22) target = $region8
    $region5: #{tpu_custom_call.1} parent=1 // loop_body
      %s26 = ssub.s32 %s21, 1
      %s27 = ssub.s32 %s21, 2
      %s28 = sadd.s32 %s21, 1
      %s29 = ssub.s32 %s21, %s28
      %p30 = scmp.eq.s32.totalorder %s29, 0
      %s32 = sadd.s32 %s31, 1
      %s33 = scalar_select %p30, %s31, %s32
      %p36 = pneg %p30
      %p37 = scmp.eq.s32.totalorder %s21, 1
      %p38 = por %p36, %p37
      %p39 = scmp.ne.s32.totalorder %s31, %s34
      %p40 = scmp.eq.s32.totalorder %s21, 0
      %p41 = por %p39, %p40
      %p42 = scmp.ne.s32.totalorder %s31, %s34
      %p43 = scmp.eq.s32.totalorder %s26, 1
      %p44 = por %p42, %p43
      %p45 = scmp.ne.s32.totalorder %s34, %s35
      %p46 = scmp.eq.s32.totalorder %s26, 0
      %p47 = por %p45, %p46
      %p48 = scmp.ne.s32.totalorder %s34, %s35
      %p49 = scmp.eq.s32.totalorder %s27, 1
      %p50 = por %p48, %p49
      %p52 = scmp.ne.s32.totalorder %s35, %s51
      %p53 = scmp.eq.s32.totalorder %s27, 0
      %p54 = por %p52, %p53
      %s55 = ssub.s32 %s21, %s28
      %p56 = scmp.eq.s32.totalorder %s55, 0
      %s58 = sadd.s32 %s57, 1
      %s59 = scalar_select %p56, %s57, %s58
      %p62 = pneg %p56
      %p63 = scmp.eq.s32.totalorder %s21, 1
      %p64 = por %p62, %p63
      %p65 = scmp.ne.s32.totalorder %s57, %s60
      %p66 = scmp.eq.s32.totalorder %s21, 0
      %p67 = por %p65, %p66
      %p68 = scmp.ne.s32.totalorder %s57, %s60
      %p69 = scmp.eq.s32.totalorder %s26, 1
      %p70 = por %p68, %p69
      %p71 = scmp.ne.s32.totalorder %s60, %s61
      %p72 = scmp.eq.s32.totalorder %s26, 0
      %p73 = por %p71, %p72
      %p74 = scmp.ne.s32.totalorder %s60, %s61
      %p75 = scmp.eq.s32.totalorder %s27, 1
      %p76 = por %p74, %p75
      %p78 = scmp.ne.s32.totalorder %s61, %s77
      %p79 = scmp.eq.s32.totalorder %s27, 0
      %p80 = por %p78, %p79
      %s81 = ssub.s32 %s21, %s28
      %p82 = scmp.eq.s32.totalorder %s81, 0
      %s84 = sadd.s32 %s83, 1
      %s85 = scalar_select %p82, %s83, %s84
      %p88 = pneg %p82
      %p89 = scmp.eq.s32.totalorder %s21, 1
      %p90 = por %p88, %p89
      %p91 = scmp.ne.s32.totalorder %s83, %s86
      %p92 = scmp.eq.s32.totalorder %s21, 0
      %p93 = por %p91, %p92
      %p94 = scmp.ne.s32.totalorder %s83, %s86
      %p95 = scmp.eq.s32.totalorder %s26, 1
      %p96 = por %p94, %p95
      %p97 = scmp.ne.s32.totalorder %s86, %s87
      %p98 = scmp.eq.s32.totalorder %s26, 0
      %p99 = por %p97, %p98
      %p100 = scmp.ne.s32.totalorder %s86, %s87
      %p101 = scmp.eq.s32.totalorder %s27, 1
      %p102 = por %p100, %p101
      %p104 = scmp.ne.s32.totalorder %s87, %s103
      %p105 = scmp.eq.s32.totalorder %s27, 0
      %p106 = por %p104, %p105
      %s107 = ssub.s32 %s21, %s28
      %p108 = scmp.eq.s32.totalorder %s107, 0
      %s110 = sadd.s32 %s109, 1
      %s111 = scalar_select %p108, %s109, %s110
      %p114 = pneg %p108
      %p115 = scmp.eq.s32.totalorder %s21, 1
      %p116 = por %p114, %p115
      %p117 = scmp.ne.s32.totalorder %s109, %s112
      %p118 = scmp.eq.s32.totalorder %s21, 0
      %p119 = por %p117, %p118
      %p120 = scmp.ne.s32.totalorder %s109, %s112
      %p121 = scmp.eq.s32.totalorder %s26, 1
      %p122 = por %p120, %p121
      %p123 = scmp.ne.s32.totalorder %s112, %s113
      %p124 = scmp.eq.s32.totalorder %s26, 0
      %p125 = por %p123, %p124
      %p126 = scmp.ne.s32.totalorder %s112, %s113
      %p127 = scmp.eq.s32.totalorder %s27, 1
      %p128 = por %p126, %p127
      %p130 = scmp.ne.s32.totalorder %s113, %s129
      %p131 = scmp.eq.s32.totalorder %s27, 0
      %p132 = por %p130, %p131
      %s133 = ssub.s32 %s21, %s28
      %p134 = scmp.eq.s32.totalorder %s133, 0
      %s136 = sadd.s32 %s135, 1
      %s137 = scalar_select %p134, %s135, %s136
      %p140 = pneg %p134
      %p141 = scmp.eq.s32.totalorder %s21, 1
      %p142 = por %p140, %p141
      %p143 = scmp.ne.s32.totalorder %s135, %s138
      %p144 = scmp.eq.s32.totalorder %s21, 0
      %p145 = por %p143, %p144
      %p146 = scmp.ne.s32.totalorder %s135, %s138
      %p147 = scmp.eq.s32.totalorder %s26, 1
      %p148 = por %p146, %p147
      %p149 = scmp.ne.s32.totalorder %s138, %s139
      %p150 = scmp.eq.s32.totalorder %s26, 0
      %p151 = por %p149, %p150
      %p152 = scmp.ne.s32.totalorder %s138, %s139
      %p153 = scmp.eq.s32.totalorder %s27, 1
      %p154 = por %p152, %p153
      %p156 = scmp.ne.s32.totalorder %s139, %s155
      %p157 = scmp.eq.s32.totalorder %s27, 0
      %p158 = por %p156, %p157
      %s160 = sadd.s32 %s159, 1
      %p163 = scmp.eq.s32.totalorder %s21, 1
      %p164 = scmp.ne.s32.totalorder %s159, %s161
      %p165 = scmp.eq.s32.totalorder %s21, 0
      %p166 = por %p164, %p165
      %p167 = scmp.ne.s32.totalorder %s159, %s161
      %p168 = scmp.eq.s32.totalorder %s26, 1
      %p169 = por %p167, %p168
      %p170 = scmp.ne.s32.totalorder %s161, %s162
      %p171 = scmp.eq.s32.totalorder %s26, 0
      %p172 = por %p170, %p171
      %p173 = scmp.ne.s32.totalorder %s161, %s162
      %p174 = scmp.eq.s32.totalorder %s27, 1
      %p175 = por %p173, %p174
      %p177 = scmp.ne.s32.totalorder %s162, %s176
      %p178 = scmp.eq.s32.totalorder %s27, 0
      %p179 = por %p177, %p178
      %s180 = ssub.s32 %s21, %s28
      %p181 = scmp.eq.s32.totalorder %s180, 0
      %s183 = sadd.s32 %s182, 1
      %s184 = scalar_select %p181, %s182, %s183
      %p187 = pneg %p181
      %p188 = scmp.eq.s32.totalorder %s21, 1
      %p189 = por %p187, %p188
      %p190 = scmp.ne.s32.totalorder %s182, %s185
      %p191 = scmp.eq.s32.totalorder %s21, 0
      %p192 = por %p190, %p191
      %p193 = scmp.ne.s32.totalorder %s182, %s185
      %p194 = scmp.eq.s32.totalorder %s26, 1
      %p195 = por %p193, %p194
      %p196 = scmp.ne.s32.totalorder %s185, %s186
      %p197 = scmp.eq.s32.totalorder %s26, 0
      %p198 = por %p196, %p197
      %p199 = scmp.ne.s32.totalorder %s185, %s186
      %p200 = scmp.eq.s32.totalorder %s27, 1
      %p201 = por %p199, %p200
      %p203 = scmp.ne.s32.totalorder %s186, %s202
      %p204 = scmp.eq.s32.totalorder %s27, 0
      %p205 = por %p203, %p204
      %s206 = ssub.s32 %s21, %s28
      %p207 = scmp.eq.s32.totalorder %s206, 0
      %s209 = sadd.s32 %s208, 1
      %s210 = scalar_select %p207, %s208, %s209
      %p213 = pneg %p207
      %p214 = scmp.eq.s32.totalorder %s21, 1
      %p215 = por %p213, %p214
      %p216 = scmp.ne.s32.totalorder %s208, %s211
      %p217 = scmp.eq.s32.totalorder %s21, 0
      %p218 = por %p216, %p217
      %p219 = scmp.ne.s32.totalorder %s208, %s211
      %p220 = scmp.eq.s32.totalorder %s26, 1
      %p221 = por %p219, %p220
      %p222 = scmp.ne.s32.totalorder %s211, %s212
      %p223 = scmp.eq.s32.totalorder %s26, 0
      %p224 = por %p222, %p223
      %p225 = scmp.ne.s32.totalorder %s211, %s212
      %p226 = scmp.eq.s32.totalorder %s27, 1
      %p227 = por %p225, %p226
      %p229 = scmp.ne.s32.totalorder %s212, %s228
      %p230 = scmp.eq.s32.totalorder %s27, 0
      %p231 = por %p229, %p230
      %s232 = ssub.s32 %s21, %s28
      %p233 = scmp.eq.s32.totalorder %s232, 0
      %s235 = sadd.s32 %s234, 1
      %s236 = scalar_select %p233, %s234, %s235
      %p239 = pneg %p233
      %p240 = scmp.eq.s32.totalorder %s21, 1
      %p241 = por %p239, %p240
      %p242 = scmp.ne.s32.totalorder %s234, %s237
      %p243 = scmp.eq.s32.totalorder %s21, 0
      %p244 = por %p242, %p243
      %p245 = scmp.ne.s32.totalorder %s234, %s237
      %p246 = scmp.eq.s32.totalorder %s26, 1
      %p247 = por %p245, %p246
      %p248 = scmp.ne.s32.totalorder %s237, %s238
      %p249 = scmp.eq.s32.totalorder %s26, 0
      %p250 = por %p248, %p249
      %p251 = scmp.ne.s32.totalorder %s237, %s238
      %p252 = scmp.eq.s32.totalorder %s27, 1
      %p253 = por %p251, %p252
      %p255 = scmp.ne.s32.totalorder %s238, %s254
      %p256 = scmp.eq.s32.totalorder %s27, 0
      %p257 = por %p255, %p256
      %p258 = scmp.le.s32.totalorder 1, %s21
      %p259 = scmp.lt.s32.totalorder %s21, 3
      %p260 = pnand %p258, %p259
      %p261 = pneg %p260
      // Predicated region
      $region9: #{tpu_custom_call.1} parent=5 // pred_check
        _
      $region10: #{tpu_custom_call.1} parent=5 // pred_check_branch
        %263 = sbr.rel (%p260) target = $region12
      $region11: #{tpu_custom_call.1} parent=5 // pred_region
        %s264 = ssub.s32 %s21, 1
        // Predicated region
        $region13: #{tpu_custom_call.1} parent=11 // pred_check
          %p265 = pneg %p172
        $region14: #{tpu_custom_call.1} parent=11 // pred_check_branch
          %267 = sbr.rel (%p265) target = $region16
        $region15: #{tpu_custom_call.1} parent=11 // pred_region
          _
        $region16: #{tpu_custom_call.1} parent=11 // pred_fallthru
          _
      $region12: #{tpu_custom_call.1} parent=5 // pred_fallthru
        _
      %p268 = scmp.lt.s32.totalorder %s21, 2
      // Predicated region
      $region17: #{tpu_custom_call.1} parent=5 // pred_check
        %p269 = pneg %p268
      $region18: #{tpu_custom_call.1} parent=5 // pred_check_branch
        %271 = sbr.rel (%p269) target = $region20
      $region19: #{tpu_custom_call.1} parent=5 // pred_region
        // Predicated region
        $region21: #{tpu_custom_call.1} parent=19 // pred_check
          %p272 = pneg %p41
        $region22: #{tpu_custom_call.1} parent=19 // pred_check_branch
          %274 = sbr.rel (%p272) target = $region24
        $region23: #{tpu_custom_call.1} parent=19 // pred_region
          %s275 = smul.u32 21, %s21
          %p276 = scmp.lt.s32.totalorder %s275, 41
          %s277 = scalar_select %p276, %s275, 41
          %s278 = smul.addr %s277, 8
          %s279 = scalar_lea.vmem %s0, %s278
          %s280 = smul.u32 21, %s21
        $region24: #{tpu_custom_call.1} parent=19 // pred_fallthru
          _
        // Predicated region
        $region25: #{tpu_custom_call.1} parent=19 // pred_check
          %p281 = pneg %p67
        $region26: #{tpu_custom_call.1} parent=19 // pred_check_branch
          %283 = sbr.rel (%p281) target = $region28
        $region27: #{tpu_custom_call.1} parent=19 // pred_region
          %s284 = smul.u32 3, %s21
          %p285 = scmp.lt.s32.totalorder %s284, 5
          %s286 = scalar_select %p285, %s284, 5
          %s287 = smul.addr %s286, 7
          %s288 = smul.addr %s287, 8
          %s289 = scalar_lea.vmem %s1, %s288
          %s290 = smul.u32 3, %s21
        $region28: #{tpu_custom_call.1} parent=19 // pred_fallthru
          _
        // Predicated region
        $region29: #{tpu_custom_call.1} parent=19 // pred_check
          %p291 = pneg %p93
        $region30: #{tpu_custom_call.1} parent=19 // pred_check_branch
          %293 = sbr.rel (%p291) target = $region32
        $region31: #{tpu_custom_call.1} parent=19 // pred_region
          %s294 = smul.u32 3, %s21
          %p295 = scmp.lt.s32.totalorder %s294, 5
          %s296 = scalar_select %p295, %s294, 5
          %s297 = scalar_lea.vmem %s2, %s296
          %s298 = smul.u32 3, %s21
        $region32: #{tpu_custom_call.1} parent=19 // pred_fallthru
          _
        // Predicated region
        $region33: #{tpu_custom_call.1} parent=19 // pred_check
          %p299 = pneg %p119
        $region34: #{tpu_custom_call.1} parent=19 // pred_check_branch
          %301 = sbr.rel (%p299) target = $region36
        $region35: #{tpu_custom_call.1} parent=19 // pred_region
          %s302 = smul.u32 3, %s21
          %p303 = scmp.lt.s32.totalorder %s302, 5
          %s304 = scalar_select %p303, %s302, 5
          %s305 = scalar_lea.vmem %s3, %s304
          %s306 = smul.u32 3, %s21
        $region36: #{tpu_custom_call.1} parent=19 // pred_fallthru
          _
        // Predicated region
        $region37: #{tpu_custom_call.1} parent=19 // pred_check
          %p307 = pneg %p145
        $region38: #{tpu_custom_call.1} parent=19 // pred_check_branch
          %309 = sbr.rel (%p307) target = $region40
        $region39: #{tpu_custom_call.1} parent=19 // pred_region
          %s310 = smul.u32 3, %s21
          %p311 = scmp.lt.s32.totalorder %s310, 5
          %s312 = scalar_select %p311, %s310, 5
          %s313 = scalar_lea.vmem %s4, %s312
          %s314 = smul.u32 3, %s21
        $region40: #{tpu_custom_call.1} parent=19 // pred_fallthru
          _
      $region20: #{tpu_custom_call.1} parent=5 // pred_fallthru
        _
      %p315 = scmp.le.s32.totalorder 1, %s21
      %p316 = scmp.lt.s32.totalorder %s21, 3
      %p317 = pnand %p315, %p316
      %p318 = pneg %p317
      // Predicated region
      $region41: #{tpu_custom_call.1} parent=5 // pred_check
        _
      $region42: #{tpu_custom_call.1} parent=5 // pred_check_branch
        %320 = sbr.rel (%p317) target = $region44
      $region43: #{tpu_custom_call.1} parent=5 // pred_region
        %s321 = ssub.s32 %s21, 1
        %s322 = smul.u32 21, %s26
        %p323 = scmp.lt.s32.totalorder %s322, 41
        %s324 = scalar_select %p323, %s322, 41
        %s325 = smul.addr %s324, 8
        %s326 = scalar_lea.vmem %s0, %s325
        %p327 = pneg %p47
        %p328 = pneg %p44
        %s329 = smul.u32 3, %s26
        %p330 = scmp.lt.s32.totalorder %s329, 5
        %s331 = scalar_select %p330, %s329, 5
        %s332 = smul.addr %s331, 7
        %s333 = smul.addr %s332, 8
        %s334 = scalar_lea.vmem %s1, %s333
        %p335 = pneg %p73
        %p336 = pneg %p70
        %s337 = smul.u32 3, %s26
        %p338 = scmp.lt.s32.totalorder %s337, 5
        %s339 = scalar_select %p338, %s337, 5
        %s340 = scalar_lea.vmem %s2, %s339
        %p341 = pneg %p99
        %p342 = pneg %p96
        %s343 = smul.u32 3, %s26
        %p344 = scmp.lt.s32.totalorder %s343, 5
        %s345 = scalar_select %p344, %s343, 5
        %s346 = scalar_lea.vmem %s3, %s345
        %p347 = pneg %p125
        %p348 = pneg %p122
        %s349 = smul.u32 3, %s26
        %p350 = scmp.lt.s32.totalorder %s349, 5
        %s351 = scalar_select %p350, %s349, 5
        %s352 = scalar_lea.vmem %s4, %s351
        %p353 = pneg %p151
        %p354 = pneg %p148
        %p355 = pneg %p172
        %p356 = pneg %p169
        %p357 = pneg %p198
        %p358 = pneg %p195
        %s359 = sand.u32 %s185, 1
        %s360 = scalar_lea.sflag [#allocation3], %s359
        %s361 = sand.u32 %s185, 1
        %s362 = smul.addr %s361, 3
        %s363 = scalar_lea.vmem [#allocation2], %s362
        %p364 = pneg %p224
        %p365 = pneg %p221
        %s366 = sand.u32 %s211, 1
        %s367 = scalar_lea.sflag [#allocation5], %s366
        %s368 = sand.u32 %s211, 1
        %s369 = smul.addr %s368, 3
        %s370 = scalar_lea.vmem [#allocation4], %s369
        %p371 = pneg %p250
        %p372 = pneg %p247
        %s373 = smul.u32 3, %s26
        %p374 = scmp.lt.s32.totalorder %s373, 5
        %s375 = scalar_select %p374, %s373, 5
        %s376 = scalar_lea.vmem %s8, %s375
        %s377 = smul.u32 21, %s26
        %p378 = scmp.lt.s32.totalorder %s377, 41
        %s379 = scalar_select %p378, %s377, 41
        %s380 = smul.addr %s379, 8
        %s381 = scalar_lea.vmem %s0, %s380
        %s382 = smul.u32 21, %s26
        %s383 = smul.u32 3, %s26
        %p384 = scmp.lt.s32.totalorder %s383, 5
        %s385 = scalar_select %p384, %s383, 5
        %s386 = smul.addr %s385, 7
        %s387 = smul.addr %s386, 8
        %s388 = scalar_lea.vmem %s1, %s387
        %s389 = smul.u32 3, %s26
        %s390 = smul.u32 3, %s26
        %p391 = scmp.lt.s32.totalorder %s390, 5
        %s392 = scalar_select %p391, %s390, 5
        %s393 = scalar_lea.vmem %s2, %s392
        %s394 = smul.u32 3, %s26
        %s395 = smul.u32 3, %s26
        %p396 = scmp.lt.s32.totalorder %s395, 5
        %s397 = scalar_select %p396, %s395, 5
        %s398 = scalar_lea.vmem %s3, %s397
        %s399 = smul.u32 3, %s26
        %s400 = smul.u32 3, %s26
        %p401 = scmp.lt.s32.totalorder %s400, 5
        %s402 = scalar_select %p401, %s400, 5
        %s403 = scalar_lea.vmem %s4, %s402
        %s404 = smul.u32 3, %s26
        %s405 = smul.u32 3, %s26
        %s406 = smul.u32 3, %s26
        %s407 = smul.u32 3, %s26
        %p408 = scmp.lt.s32.totalorder %s407, 5
        %s409 = scalar_select %p408, %s407, 5
        %s410 = scalar_lea.vmem %s8, %s409
        %s411 = smul.u32 3, %s26
        %v412 = vld [vmem:[%s381] sm:$0xff]
        %v413 = vld [vmem:[%s381 + $0x8] sm:$0xff]
        %v414 = vld [vmem:[%s381 + $0x10] sm:$0xff]
        %v415 = vld [vmem:[%s381 + $0x18] sm:$0xff]
        %v416 = vld [vmem:[%s381 + $0x20] sm:$0xff]
        %v417 = vld [vmem:[%s381 + $0x28] sm:$0xff]
        %v418 = vld [vmem:[%s381 + $0x30] sm:$0xff]
        %v419 = vld [vmem:[%s381 + $0x38] sm:$0xff]
        %v420 = vld [vmem:[%s381 + $0x40] sm:$0xff]
        %v421 = vld [vmem:[%s381 + $0x48] sm:$0xff]
        %v422 = vld [vmem:[%s381 + $0x50] sm:$0xff]
        %v423 = vld [vmem:[%s381 + $0x58] sm:$0xff]
        %v424 = vld [vmem:[%s381 + $0x60] sm:$0xff]
        %v425 = vld [vmem:[%s381 + $0x68] sm:$0xff]
        %v426 = vld [vmem:[%s381 + $0x70] sm:$0xff]
        %v427 = vld [vmem:[%s381 + $0x78] sm:$0xff]
        %v428 = vld [vmem:[%s381 + $0x80] sm:$0xff]
        %v429 = vld [vmem:[%s381 + $0x88] sm:$0xff]
        %v430 = vld [vmem:[%s381 + $0x90] sm:$0xff]
        %v431 = vld [vmem:[%s381 + $0x98] sm:$0xff]
        %v432 = vld [vmem:[%s381 + $0xa0] sm:$0xff]
        %v433 = vld [vmem:[%s5] sm:$0xff]
        %vm434 = vcmask 64512
        %v436 = vsel %vm434, %v412, 0
        %v439 = vsel %vm434, %v413, 0
        %v442 = vsel %vm434, %v414, 0
        %v445 = vsel %vm434, %v415, 0
        %v448 = vsel %vm434, %v416, 0
        %v451 = vsel %vm434, %v417, 0
        %v454 = vsel %vm434, %v418, 0
        %v457 = vsel %vm434, %v419, 0
        %v460 = vsel %vm434, %v420, 0
        %v463 = vsel %vm434, %v421, 0
        %v466 = vsel %vm434, %v422, 0
        %v469 = vsel %vm434, %v423, 0
        %v472 = vsel %vm434, %v424, 0
        %v475 = vsel %vm434, %v425, 0
        %v478 = vsel %vm434, %v426, 0
        %v481 = vsel %vm434, %v427, 0
        %v484 = vsel %vm434, %v428, 0
        %v487 = vsel %vm434, %v429, 0
        %v490 = vsel %vm434, %v430, 0
        %v493 = vsel %vm434, %v431, 0
        %v496 = vsel %vm434, %v432, 0
        %498 = vmatprep.subr.mxu0 0.0
        %499 = vmatpush1.msra.mxu0 0.0
        %500 = vmatprep.subr.mxu0 0.0
        %501 = vmatpush1.msra.mxu0 0.0
        %502 = vmatprep.subr.mxu0 0.0
        %503 = vmatpush1.msra.mxu0 0.0
        %504 = vmatprep.subr.mxu0 0.0
        %505 = vmatpush1.msra.mxu0 0.0
        %506 = vmatprep.subr.mxu0 0.0
        %507 = vmatpush1.msra.mxu0 0.0
        %508 = vmatprep.subr.mxu0 0.0
        %509 = vmatpush1.msra.mxu0 0.0
        %510 = vmatprep.subr.mxu0 0.0
        %511 = vmatpush1.msra.mxu0 0.0
        %512 = vmatprep.subr.mxu0 0.0
        %513 = vmatpush1.msra.mxu0 0.0
        %514 = vmatprep.subr.mxu0 0.0
        %515 = vmatpush1.msra.mxu0 0.0
        %516 = vmatprep.subr.mxu0 0.0
        %517 = vmatpush1.msra.mxu0 0.0
        %518 = vmatprep.subr.mxu0 0.0
        %519 = vmatpush1.msra.mxu0 0.0
        %520 = vmatprep.subr.mxu0 0.0
        %521 = vmatpush1.msra.mxu0 0.0
        %522 = vmatprep.subr.mxu0 0.0
        %523 = vmatpush1.msra.mxu0 0.0
        %524 = vmatprep.subr.mxu0 0.0
        %525 = vmatpush1.msra.mxu0 0.0
        %526 = vmatprep.subr.mxu0 0.0
        %527 = vmatpush1.msra.mxu0 0.0
        %528 = vmatprep.subr.mxu0 0.0
        %529 = vmatpush1.msra.mxu0 %v433
        %530 = vmatprep.subr.mxu0 0.0
        %531 = vmatpush2.msra.mxu0 0.0
        %532 = vmatprep.subr.mxu0 0.0
        %533 = vmatpush2.msra.mxu0 0.0
        %534 = vmatprep.subr.mxu0 0.0
        %535 = vmatpush2.msra.mxu0 0.0
        %536 = vmatprep.subr.mxu0 0.0
        %537 = vmatpush2.msra.mxu0 0.0
        %538 = vmatprep.subr.mxu0 0.0
        %539 = vmatpush2.msra.mxu0 0.0
        %540 = vmatprep.subr.mxu0 0.0
        %541 = vmatpush2.msra.mxu0 0.0
        %542 = vmatprep.subr.mxu0 0.0
        %543 = vmatpush2.msra.mxu0 0.0
        %544 = vmatprep.subr.mxu0 0.0
        %545 = vmatpush2.msra.mxu0 0.0
        %546 = vmatprep.subr.mxu0 0.0
        %547 = vmatpush2.msra.mxu0 0.0
        %548 = vmatprep.subr.mxu0 0.0
        %549 = vmatpush2.msra.mxu0 0.0
        %550 = vmatprep.subr.mxu0 0.0
        %551 = vmatpush2.msra.mxu0 0.0
        %552 = vmatprep.subr.mxu0 0.0
        %553 = vmatpush2.msra.mxu0 0.0
        %554 = vmatprep.subr.mxu0 0.0
        %555 = vmatpush2.msra.mxu0 0.0
        %556 = vmatprep.subr.mxu0 0.0
        %557 = vmatpush2.msra.mxu0 0.0
        %558 = vmatprep.subr.mxu0 0.0
        %559 = vmatpush2.msra.mxu0 0.0
        %560 = vmatprep.subr.mxu0 0.0
        %561 = vmatpush2.msra.mxu0 0.0
        %562 = vmatprep.mubr.f32.mxu0 0.0
        %563 = vmatmul.mubr.f32.gmra.mxu0 %v436
        %v564 = vpop.f32.mrf.mxu0
        %v565 = vadd.f32 0.0, %v564
        %v566 = vpop.f32.mrf.mxu0
        %567 = vmatprep.mubr.f32.mxu0 0.0
        %568 = vmatmul.mubr.f32.gmra.mxu0 %v439
        %v569 = vpop.f32.mrf.mxu0
        %v570 = vadd.f32 0.0, %v569
        %v571 = vpop.f32.mrf.mxu0
        %572 = vmatprep.mubr.f32.mxu0 0.0
        %573 = vmatmul.mubr.f32.gmra.mxu0 %v442
        %v574 = vpop.f32.mrf.mxu0
        %v575 = vadd.f32 0.0, %v574
        %v576 = vpop.f32.mrf.mxu0
        %577 = vmatprep.mubr.f32.mxu0 0.0
        %578 = vmatmul.mubr.f32.gmra.mxu0 %v445
        %v579 = vpop.f32.mrf.mxu0
        %v580 = vadd.f32 0.0, %v579
        %v581 = vpop.f32.mrf.mxu0
        %582 = vmatprep.mubr.f32.mxu0 0.0
        %583 = vmatmul.mubr.f32.gmra.mxu0 %v448
        %v584 = vpop.f32.mrf.mxu0
        %v585 = vadd.f32 0.0, %v584
        %v586 = vpop.f32.mrf.mxu0
        %587 = vmatprep.mubr.f32.mxu0 0.0
        %588 = vmatmul.mubr.f32.gmra.mxu0 %v451
        %v589 = vpop.f32.mrf.mxu0
        %v590 = vadd.f32 0.0, %v589
        %v591 = vpop.f32.mrf.mxu0
        %592 = vmatprep.mubr.f32.mxu0 0.0
        %593 = vmatmul.mubr.f32.gmra.mxu0 %v454
        %v594 = vpop.f32.mrf.mxu0
        %v595 = vadd.f32 0.0, %v594
        %v596 = vpop.f32.mrf.mxu0
        %597 = vmatprep.mubr.f32.mxu0 0.0
        %598 = vmatmul.mubr.f32.gmra.mxu0 %v457
        %v599 = vpop.f32.mrf.mxu0
        %v600 = vadd.f32 0.0, %v599
        %v601 = vpop.f32.mrf.mxu0
        %602 = vmatprep.mubr.f32.mxu0 0.0
        %603 = vmatmul.mubr.f32.gmra.mxu0 %v460
        %v604 = vpop.f32.mrf.mxu0
        %v605 = vadd.f32 0.0, %v604
        %v606 = vpop.f32.mrf.mxu0
        %607 = vmatprep.mubr.f32.mxu0 0.0
        %608 = vmatmul.mubr.f32.gmra.mxu0 %v463
        %v609 = vpop.f32.mrf.mxu0
        %v610 = vadd.f32 0.0, %v609
        %v611 = vpop.f32.mrf.mxu0
        %612 = vmatprep.mubr.f32.mxu0 0.0
        %613 = vmatmul.mubr.f32.gmra.mxu0 %v466
        %v614 = vpop.f32.mrf.mxu0
        %v615 = vadd.f32 0.0, %v614
        %v616 = vpop.f32.mrf.mxu0
        %617 = vmatprep.mubr.f32.mxu0 0.0
        %618 = vmatmul.mubr.f32.gmra.mxu0 %v469
        %v619 = vpop.f32.mrf.mxu0
        %v620 = vadd.f32 0.0, %v619
        %v621 = vpop.f32.mrf.mxu0
        %622 = vmatprep.mubr.f32.mxu0 0.0
        %623 = vmatmul.mubr.f32.gmra.mxu0 %v472
        %v624 = vpop.f32.mrf.mxu0
        %v625 = vadd.f32 0.0, %v624
        %v626 = vpop.f32.mrf.mxu0
        %627 = vmatprep.mubr.f32.mxu0 0.0
        %628 = vmatmul.mubr.f32.gmra.mxu0 %v475
        %v629 = vpop.f32.mrf.mxu0
        %v630 = vadd.f32 0.0, %v629
        %v631 = vpop.f32.mrf.mxu0
        %632 = vmatprep.mubr.f32.mxu0 0.0
        %633 = vmatmul.mubr.f32.gmra.mxu0 %v478
        %v634 = vpop.f32.mrf.mxu0
        %v635 = vadd.f32 0.0, %v634
        %v636 = vpop.f32.mrf.mxu0
        %637 = vmatprep.mubr.f32.mxu0 0.0
        %638 = vmatmul.mubr.f32.gmra.mxu0 %v481
        %v639 = vpop.f32.mrf.mxu0
        %v640 = vadd.f32 0.0, %v639
        %v641 = vpop.f32.mrf.mxu0
        %642 = vmatprep.mubr.f32.mxu0 0.0
        %643 = vmatmul.mubr.f32.gmra.mxu0 %v484
        %v644 = vpop.f32.mrf.mxu0
        %v645 = vadd.f32 0.0, %v644
        %v646 = vpop.f32.mrf.mxu0
        %647 = vmatprep.mubr.f32.mxu0 0.0
        %648 = vmatmul.mubr.f32.gmra.mxu0 %v487
        %v649 = vpop.f32.mrf.mxu0
        %v650 = vadd.f32 0.0, %v649
        %v651 = vpop.f32.mrf.mxu0
        %652 = vmatprep.mubr.f32.mxu0 0.0
        %653 = vmatmul.mubr.f32.gmra.mxu0 %v490
        %v654 = vpop.f32.mrf.mxu0
        %v655 = vadd.f32 0.0, %v654
        %v656 = vpop.f32.mrf.mxu0
        %657 = vmatprep.mubr.f32.mxu0 0.0
        %658 = vmatmul.mubr.f32.gmra.mxu0 %v493
        %v659 = vpop.f32.mrf.mxu0
        %v660 = vadd.f32 0.0, %v659
        %v661 = vpop.f32.mrf.mxu0
        %662 = vmatprep.mubr.f32.mxu0 0.0
        %663 = vmatmul.mubr.f32.gmra.mxu0 %v496
        %v664 = vpop.f32.mrf.mxu0
        %v665 = vadd.f32 0.0, %v664
        %v666 = vpop.f32.mrf.mxu0
        %667 = vdwg.mxu0
        %v668 = vadd.f32 %v565, %v570
        %v669 = vadd.f32 %v668, %v575
        %v670 = vadd.f32 %v669, %v580
        %v671 = vadd.f32 %v670, %v585
        %v672 = vadd.f32 %v671, %v590
        %v673 = vadd.f32 %v672, %v595
        %v674 = vrot.slane %v673, 4
        %v675 = vadd.f32 %v673, %v674
        %v676 = vrot.slane %v675, 2
        %v677 = vadd.f32 %v675, %v676
        %v678 = vrot.slane %v677, 1
        %v679 = vadd.f32 %v677, %v678
        %v680 = vadd.f32 %v600, %v605
        %v681 = vadd.f32 %v680, %v610
        %v682 = vadd.f32 %v681, %v615
        %v683 = vadd.f32 %v682, %v620
        %v684 = vadd.f32 %v683, %v625
        %v685 = vadd.f32 %v684, %v630
        %v686 = vrot.slane %v685, 4
        %v687 = vadd.f32 %v685, %v686
        %v688 = vrot.slane %v687, 2
        %v689 = vadd.f32 %v687, %v688
        %v690 = vrot.slane %v689, 1
        %v691 = vadd.f32 %v689, %v690
        %v692 = vadd.f32 %v635, %v640
        %v693 = vadd.f32 %v692, %v645
        %v694 = vadd.f32 %v693, %v650
        %v695 = vadd.f32 %v694, %v655
        %v696 = vadd.f32 %v695, %v660
        %v697 = vadd.f32 %v696, %v665
        %v698 = vrot.slane %v697, 4
        %v699 = vadd.f32 %v697, %v698
        %v700 = vrot.slane %v699, 2
        %v701 = vadd.f32 %v699, %v700
        %v702 = vrot.slane %v701, 1
        %v703 = vadd.f32 %v701, %v702
        %v704 = vmul.f32 %v679, 0.020408163
        %v705 = vmul.f32 %v691, 0.020408163
        %v706 = vmul.f32 %v703, 0.020408163
        %v707 = vld [vmem:[%s388] sm:$0xff]
        %v708 = vld [vmem:[%s388 + $0x8] sm:$0xff]
        %v709 = vld [vmem:[%s388 + $0x10] sm:$0xff]
        %v710 = vld [vmem:[%s388 + $0x18] sm:$0xff]
        %v711 = vld [vmem:[%s388 + $0x20] sm:$0xff]
        %v712 = vld [vmem:[%s388 + $0x28] sm:$0xff]
        %v713 = vld [vmem:[%s388 + $0x30] sm:$0xff]
        %v714 = vld [vmem:[%s388 + $0x38] sm:$0xff]
        %v715 = vld [vmem:[%s388 + $0x40] sm:$0xff]
        %v716 = vld [vmem:[%s388 + $0x48] sm:$0xff]
        %v717 = vld [vmem:[%s388 + $0x50] sm:$0xff]
        %v718 = vld [vmem:[%s388 + $0x58] sm:$0xff]
        %v719 = vld [vmem:[%s388 + $0x60] sm:$0xff]
        %v720 = vld [vmem:[%s388 + $0x68] sm:$0xff]
        %v721 = vld [vmem:[%s388 + $0x70] sm:$0xff]
        %v722 = vld [vmem:[%s388 + $0x78] sm:$0xff]
        %v723 = vld [vmem:[%s388 + $0x80] sm:$0xff]
        %v724 = vld [vmem:[%s388 + $0x88] sm:$0xff]
        %v725 = vld [vmem:[%s388 + $0x90] sm:$0xff]
        %v726 = vld [vmem:[%s388 + $0x98] sm:$0xff]
        %v727 = vld [vmem:[%s388 + $0xa0] sm:$0xff]
        %v728 = vmul.f32 %v565, 0.7
        %v729 = vmul.f32 %v570, 0.7
        %v730 = vmul.f32 %v575, 0.7
        %v731 = vmul.f32 %v580, 0.7
        %v732 = vmul.f32 %v585, 0.7
        %v733 = vmul.f32 %v590, 0.7
        %v734 = vmul.f32 %v595, 0.7
        %v735 = vmul.f32 %v600, 0.7
        %v736 = vmul.f32 %v605, 0.7
        %v737 = vmul.f32 %v610, 0.7
        %v738 = vmul.f32 %v615, 0.7
        %v739 = vmul.f32 %v620, 0.7
        %v740 = vmul.f32 %v625, 0.7
        %v741 = vmul.f32 %v630, 0.7
        %v742 = vmul.f32 %v635, 0.7
        %v743 = vmul.f32 %v640, 0.7
        %v744 = vmul.f32 %v645, 0.7
        %v745 = vmul.f32 %v650, 0.7
        %v746 = vmul.f32 %v655, 0.7
        %v747 = vmul.f32 %v660, 0.7
        %v748 = vmul.f32 %v665, 0.7
        %v749 = vmul.f32 %v704, 0.3
        %v750 = vmul.f32 %v705, 0.3
        %v751 = vmul.f32 %v706, 0.3
        %v752 = vadd.f32 %v728, %v749
        %v753 = vadd.f32 %v729, %v749
        %v754 = vadd.f32 %v730, %v749
        %v755 = vadd.f32 %v731, %v749
        %v756 = vadd.f32 %v732, %v749
        %v757 = vadd.f32 %v733, %v749
        %v758 = vadd.f32 %v734, %v749
        %v759 = vadd.f32 %v735, %v750
        %v760 = vadd.f32 %v736, %v750
        %v761 = vadd.f32 %v737, %v750
        %v762 = vadd.f32 %v738, %v750
        %v763 = vadd.f32 %v739, %v750
        %v764 = vadd.f32 %v740, %v750
        %v765 = vadd.f32 %v741, %v750
        %v766 = vadd.f32 %v742, %v751
        %v767 = vadd.f32 %v743, %v751
        %v768 = vadd.f32 %v744, %v751
        %v769 = vadd.f32 %v745, %v751
        %v770 = vadd.f32 %v746, %v751
        %v771 = vadd.f32 %v747, %v751
        %v772 = vadd.f32 %v748, %v751
        %773 = vmax.xlane.f32.xlu0 %v707
        %v774 = vpop.xlane.xlu0 %773
        %775 = vmax.xlane.f32.xlu0 %v708
        %v776 = vpop.xlane.xlu0 %775
        %777 = vmax.xlane.f32.xlu0 %v709
        %v778 = vpop.xlane.xlu0 %777
        %779 = vmax.xlane.f32.xlu0 %v710
        %v780 = vpop.xlane.xlu0 %779
        %781 = vmax.xlane.f32.xlu0 %v711
        %v782 = vpop.xlane.xlu0 %781
        %783 = vmax.xlane.f32.xlu0 %v712
        %v784 = vpop.xlane.xlu0 %783
        %785 = vmax.xlane.f32.xlu0 %v713
        %v786 = vpop.xlane.xlu0 %785
        %787 = vmax.xlane.f32.xlu0 %v714
        %v788 = vpop.xlane.xlu0 %787
        %789 = vmax.xlane.f32.xlu0 %v715
        %v790 = vpop.xlane.xlu0 %789
        %791 = vmax.xlane.f32.xlu0 %v716
        %v792 = vpop.xlane.xlu0 %791
        %793 = vmax.xlane.f32.xlu0 %v717
        %v794 = vpop.xlane.xlu0 %793
        %795 = vmax.xlane.f32.xlu0 %v718
        %v796 = vpop.xlane.xlu0 %795
        %797 = vmax.xlane.f32.xlu0 %v719
        %v798 = vpop.xlane.xlu0 %797
        %799 = vmax.xlane.f32.xlu0 %v720
        %v800 = vpop.xlane.xlu0 %799
        %801 = vmax.xlane.f32.xlu0 %v721
        %v802 = vpop.xlane.xlu0 %801
        %803 = vmax.xlane.f32.xlu0 %v722
        %v804 = vpop.xlane.xlu0 %803
        %805 = vmax.xlane.f32.xlu0 %v723
        %v806 = vpop.xlane.xlu0 %805
        %807 = vmax.xlane.f32.xlu0 %v724
        %v808 = vpop.xlane.xlu0 %807
        %809 = vmax.xlane.f32.xlu0 %v725
        %v810 = vpop.xlane.xlu0 %809
        %811 = vmax.xlane.f32.xlu0 %v726
        %v812 = vpop.xlane.xlu0 %811
        %813 = vmax.xlane.f32.xlu0 %v727
        %v814 = vpop.xlane.xlu0 %813
        %v815 = vsub.f32 %v707, %v774
        %v816 = vsub.f32 %v708, %v776
        %v817 = vsub.f32 %v709, %v778
        %v818 = vsub.f32 %v710, %v780
        %v819 = vsub.f32 %v711, %v782
        %v820 = vsub.f32 %v712, %v784
        %v821 = vsub.f32 %v713, %v786
        %v822 = vsub.f32 %v714, %v788
        %v823 = vsub.f32 %v715, %v790
        %v824 = vsub.f32 %v716, %v792
        %v825 = vsub.f32 %v717, %v794
        %v826 = vsub.f32 %v718, %v796
        %v827 = vsub.f32 %v719, %v798
        %v828 = vsub.f32 %v720, %v800
        %v829 = vsub.f32 %v721, %v802
        %v830 = vsub.f32 %v722, %v804
        %v831 = vsub.f32 %v723, %v806
        %v832 = vsub.f32 %v724, %v808
        %v833 = vsub.f32 %v725, %v810
        %v834 = vsub.f32 %v726, %v812
        %v835 = vsub.f32 %v727, %v814
        %v836 = vmul.f32 %v815, 1.442695
        %v837 = vpow.pop %v836
        %v838 = vmul.f32 %v816, 1.442695
        %v839 = vpow.pop %v838
        %v840 = vmul.f32 %v817, 1.442695
        %v841 = vpow.pop %v840
        %v842 = vmul.f32 %v818, 1.442695
        %v843 = vpow.pop %v842
        %v844 = vmul.f32 %v819, 1.442695
        %v845 = vpow.pop %v844
        %v846 = vmul.f32 %v820, 1.442695
        %v847 = vpow.pop %v846
        %v848 = vmul.f32 %v821, 1.442695
        %v849 = vpow.pop %v848
        %v850 = vmul.f32 %v822, 1.442695
        %v851 = vpow.pop %v850
        %v852 = vmul.f32 %v823, 1.442695
        %v853 = vpow.pop %v852
        %v854 = vmul.f32 %v824, 1.442695
        %v855 = vpow.pop %v854
        %v856 = vmul.f32 %v825, 1.442695
        %v857 = vpow.pop %v856
        %v858 = vmul.f32 %v826, 1.442695
        %v859 = vpow.pop %v858
        %v860 = vmul.f32 %v827, 1.442695
        %v861 = vpow.pop %v860
        %v862 = vmul.f32 %v828, 1.442695
        %v863 = vpow.pop %v862
        %v864 = vmul.f32 %v829, 1.442695
        %v865 = vpow.pop %v864
        %v866 = vmul.f32 %v830, 1.442695
        %v867 = vpow.pop %v866
        %v868 = vmul.f32 %v831, 1.442695
        %v869 = vpow.pop %v868
        %v870 = vmul.f32 %v832, 1.442695
        %v871 = vpow.pop %v870
        %v872 = vmul.f32 %v833, 1.442695
        %v873 = vpow.pop %v872
        %v874 = vmul.f32 %v834, 1.442695
        %v875 = vpow.pop %v874
        %v876 = vmul.f32 %v835, 1.442695
        %v877 = vpow.pop %v876
        %878 = vadd.xlane.f32.xlu0 %v837
        %v879 = vpop.xlane.xlu0 %878
        %880 = vadd.xlane.f32.xlu0 %v839
        %v881 = vpop.xlane.xlu0 %880
        %882 = vadd.xlane.f32.xlu0 %v841
        %v883 = vpop.xlane.xlu0 %882
        %884 = vadd.xlane.f32.xlu0 %v843
        %v885 = vpop.xlane.xlu0 %884
        %886 = vadd.xlane.f32.xlu0 %v845
        %v887 = vpop.xlane.xlu0 %886
        %888 = vadd.xlane.f32.xlu0 %v847
        %v889 = vpop.xlane.xlu0 %888
        %890 = vadd.xlane.f32.xlu0 %v849
        %v891 = vpop.xlane.xlu0 %890
        %892 = vadd.xlane.f32.xlu0 %v851
        %v893 = vpop.xlane.xlu0 %892
        %894 = vadd.xlane.f32.xlu0 %v853
        %v895 = vpop.xlane.xlu0 %894
        %896 = vadd.xlane.f32.xlu0 %v855
        %v897 = vpop.xlane.xlu0 %896
        %898 = vadd.xlane.f32.xlu0 %v857
        %v899 = vpop.xlane.xlu0 %898
        %900 = vadd.xlane.f32.xlu0 %v859
        %v901 = vpop.xlane.xlu0 %900
        %902 = vadd.xlane.f32.xlu0 %v861
        %v903 = vpop.xlane.xlu0 %902
        %904 = vadd.xlane.f32.xlu0 %v863
        %v905 = vpop.xlane.xlu0 %904
        %906 = vadd.xlane.f32.xlu0 %v865
        %v907 = vpop.xlane.xlu0 %906
        %908 = vadd.xlane.f32.xlu0 %v867
        %v909 = vpop.xlane.xlu0 %908
        %910 = vadd.xlane.f32.xlu0 %v869
        %v911 = vpop.xlane.xlu0 %910
        %912 = vadd.xlane.f32.xlu0 %v871
        %v913 = vpop.xlane.xlu0 %912
        %914 = vadd.xlane.f32.xlu0 %v873
        %v915 = vpop.xlane.xlu0 %914
        %916 = vadd.xlane.f32.xlu0 %v875
        %v917 = vpop.xlane.xlu0 %916
        %918 = vadd.xlane.f32.xlu0 %v877
        %v919 = vpop.xlane.xlu0 %918
        %v920 = vlog2.pop %v879
        %v921 = vmul.f32 %v920, 0.6931472
        %v922 = vlog2.pop %v881
        %v923 = vmul.f32 %v922, 0.6931472
        %v924 = vlog2.pop %v883
        %v925 = vmul.f32 %v924, 0.6931472
        %v926 = vlog2.pop %v885
        %v927 = vmul.f32 %v926, 0.6931472
        %v928 = vlog2.pop %v887
        %v929 = vmul.f32 %v928, 0.6931472
        %v930 = vlog2.pop %v889
        %v931 = vmul.f32 %v930, 0.6931472
        %v932 = vlog2.pop %v891
        %v933 = vmul.f32 %v932, 0.6931472
        %v934 = vlog2.pop %v893
        %v935 = vmul.f32 %v934, 0.6931472
        %v936 = vlog2.pop %v895
        %v937 = vmul.f32 %v936, 0.6931472
        %v938 = vlog2.pop %v897
        %v939 = vmul.f32 %v938, 0.6931472
        %v940 = vlog2.pop %v899
        %v941 = vmul.f32 %v940, 0.6931472
        %v942 = vlog2.pop %v901
        %v943 = vmul.f32 %v942, 0.6931472
        %v944 = vlog2.pop %v903
        %v945 = vmul.f32 %v944, 0.6931472
        %v946 = vlog2.pop %v905
        %v947 = vmul.f32 %v946, 0.6931472
        %v948 = vlog2.pop %v907
        %v949 = vmul.f32 %v948, 0.6931472
        %v950 = vlog2.pop %v909
        %v951 = vmul.f32 %v950, 0.6931472
        %v952 = vlog2.pop %v911
        %v953 = vmul.f32 %v952, 0.6931472
        %v954 = vlog2.pop %v913
        %v955 = vmul.f32 %v954, 0.6931472
        %v956 = vlog2.pop %v915
        %v957 = vmul.f32 %v956, 0.6931472
        %v958 = vlog2.pop %v917
        %v959 = vmul.f32 %v958, 0.6931472
        %v960 = vlog2.pop %v919
        %v961 = vmul.f32 %v960, 0.6931472
        %v962 = vsub.f32 %v815, %v921
        %v963 = vsub.f32 %v816, %v923
        %v964 = vsub.f32 %v817, %v925
        %v965 = vsub.f32 %v818, %v927
        %v966 = vsub.f32 %v819, %v929
        %v967 = vsub.f32 %v820, %v931
        %v968 = vsub.f32 %v821, %v933
        %v969 = vsub.f32 %v822, %v935
        %v970 = vsub.f32 %v823, %v937
        %v971 = vsub.f32 %v824, %v939
        %v972 = vsub.f32 %v825, %v941
        %v973 = vsub.f32 %v826, %v943
        %v974 = vsub.f32 %v827, %v945
        %v975 = vsub.f32 %v828, %v947
        %v976 = vsub.f32 %v829, %v949
        %v977 = vsub.f32 %v830, %v951
        %v978 = vsub.f32 %v831, %v953
        %v979 = vsub.f32 %v832, %v955
        %v980 = vsub.f32 %v833, %v957
        %v981 = vsub.f32 %v834, %v959
        %v982 = vsub.f32 %v835, %v961
        %983 = vmax.xlane.f32.xlu0 %v752
        %v984 = vpop.xlane.xlu0 %983
        %985 = vmax.xlane.f32.xlu0 %v753
        %v986 = vpop.xlane.xlu0 %985
        %987 = vmax.xlane.f32.xlu0 %v754
        %v988 = vpop.xlane.xlu0 %987
        %989 = vmax.xlane.f32.xlu0 %v755
        %v990 = vpop.xlane.xlu0 %989
        %991 = vmax.xlane.f32.xlu0 %v756
        %v992 = vpop.xlane.xlu0 %991
        %993 = vmax.xlane.f32.xlu0 %v757
        %v994 = vpop.xlane.xlu0 %993
        %995 = vmax.xlane.f32.xlu0 %v758
        %v996 = vpop.xlane.xlu0 %995
        %997 = vmax.xlane.f32.xlu0 %v759
        %v998 = vpop.xlane.xlu0 %997
        %999 = vmax.xlane.f32.xlu0 %v760
        %v1000 = vpop.xlane.xlu0 %999
        %1001 = vmax.xlane.f32.xlu0 %v761
        %v1002 = vpop.xlane.xlu0 %1001
        %1003 = vmax.xlane.f32.xlu0 %v762
        %v1004 = vpop.xlane.xlu0 %1003
        %1005 = vmax.xlane.f32.xlu0 %v763
        %v1006 = vpop.xlane.xlu0 %1005
        %1007 = vmax.xlane.f32.xlu0 %v764
        %v1008 = vpop.xlane.xlu0 %1007
        %1009 = vmax.xlane.f32.xlu0 %v765
        %v1010 = vpop.xlane.xlu0 %1009
        %1011 = vmax.xlane.f32.xlu0 %v766
        %v1012 = vpop.xlane.xlu0 %1011
        %1013 = vmax.xlane.f32.xlu0 %v767
        %v1014 = vpop.xlane.xlu0 %1013
        %1015 = vmax.xlane.f32.xlu0 %v768
        %v1016 = vpop.xlane.xlu0 %1015
        %1017 = vmax.xlane.f32.xlu0 %v769
        %v1018 = vpop.xlane.xlu0 %1017
        %1019 = vmax.xlane.f32.xlu0 %v770
        %v1020 = vpop.xlane.xlu0 %1019
        %1021 = vmax.xlane.f32.xlu0 %v771
        %v1022 = vpop.xlane.xlu0 %1021
        %1023 = vmax.xlane.f32.xlu0 %v772
        %v1024 = vpop.xlane.xlu0 %1023
        %v1025 = vsub.f32 %v752, %v984
        %v1026 = vsub.f32 %v753, %v986
        %v1027 = vsub.f32 %v754, %v988
        %v1028 = vsub.f32 %v755, %v990
        %v1029 = vsub.f32 %v756, %v992
        %v1030 = vsub.f32 %v757, %v994
        %v1031 = vsub.f32 %v758, %v996
        %v1032 = vsub.f32 %v759, %v998
        %v1033 = vsub.f32 %v760, %v1000
        %v1034 = vsub.f32 %v761, %v1002
        %v1035 = vsub.f32 %v762, %v1004
        %v1036 = vsub.f32 %v763, %v1006
        %v1037 = vsub.f32 %v764, %v1008
        %v1038 = vsub.f32 %v765, %v1010
        %v1039 = vsub.f32 %v766, %v1012
        %v1040 = vsub.f32 %v767, %v1014
        %v1041 = vsub.f32 %v768, %v1016
        %v1042 = vsub.f32 %v769, %v1018
        %v1043 = vsub.f32 %v770, %v1020
        %v1044 = vsub.f32 %v771, %v1022
        %v1045 = vsub.f32 %v772, %v1024
        %v1046 = vmul.f32 %v1025, 1.442695
        %v1047 = vpow.pop %v1046
        %v1048 = vmul.f32 %v1026, 1.442695
        %v1049 = vpow.pop %v1048
        %v1050 = vmul.f32 %v1027, 1.442695
        %v1051 = vpow.pop %v1050
        %v1052 = vmul.f32 %v1028, 1.442695
        %v1053 = vpow.pop %v1052
        %v1054 = vmul.f32 %v1029, 1.442695
        %v1055 = vpow.pop %v1054
        %v1056 = vmul.f32 %v1030, 1.442695
        %v1057 = vpow.pop %v1056
        %v1058 = vmul.f32 %v1031, 1.442695
        %v1059 = vpow.pop %v1058
        %v1060 = vmul.f32 %v1032, 1.442695
        %v1061 = vpow.pop %v1060
        %v1062 = vmul.f32 %v1033, 1.442695
        %v1063 = vpow.pop %v1062
        %v1064 = vmul.f32 %v1034, 1.442695
        %v1065 = vpow.pop %v1064
        %v1066 = vmul.f32 %v1035, 1.442695
        %v1067 = vpow.pop %v1066
        %v1068 = vmul.f32 %v1036, 1.442695
        %v1069 = vpow.pop %v1068
        %v1070 = vmul.f32 %v1037, 1.442695
        %v1071 = vpow.pop %v1070
        %v1072 = vmul.f32 %v1038, 1.442695
        %v1073 = vpow.pop %v1072
        %v1074 = vmul.f32 %v1039, 1.442695
        %v1075 = vpow.pop %v1074
        %v1076 = vmul.f32 %v1040, 1.442695
        %v1077 = vpow.pop %v1076
        %v1078 = vmul.f32 %v1041, 1.442695
        %v1079 = vpow.pop %v1078
        %v1080 = vmul.f32 %v1042, 1.442695
        %v1081 = vpow.pop %v1080
        %v1082 = vmul.f32 %v1043, 1.442695
        %v1083 = vpow.pop %v1082
        %v1084 = vmul.f32 %v1044, 1.442695
        %v1085 = vpow.pop %v1084
        %v1086 = vmul.f32 %v1045, 1.442695
        %v1087 = vpow.pop %v1086
        %1088 = vadd.xlane.f32.xlu0 %v1047
        %v1089 = vpop.xlane.xlu0 %1088
        %1090 = vadd.xlane.f32.xlu0 %v1049
        %v1091 = vpop.xlane.xlu0 %1090
        %1092 = vadd.xlane.f32.xlu0 %v1051
        %v1093 = vpop.xlane.xlu0 %1092
        %1094 = vadd.xlane.f32.xlu0 %v1053
        %v1095 = vpop.xlane.xlu0 %1094
        %1096 = vadd.xlane.f32.xlu0 %v1055
        %v1097 = vpop.xlane.xlu0 %1096
        %1098 = vadd.xlane.f32.xlu0 %v1057
        %v1099 = vpop.xlane.xlu0 %1098
        %1100 = vadd.xlane.f32.xlu0 %v1059
        %v1101 = vpop.xlane.xlu0 %1100
        %1102 = vadd.xlane.f32.xlu0 %v1061
        %v1103 = vpop.xlane.xlu0 %1102
        %1104 = vadd.xlane.f32.xlu0 %v1063
        %v1105 = vpop.xlane.xlu0 %1104
        %1106 = vadd.xlane.f32.xlu0 %v1065
        %v1107 = vpop.xlane.xlu0 %1106
        %1108 = vadd.xlane.f32.xlu0 %v1067
        %v1109 = vpop.xlane.xlu0 %1108
        %1110 = vadd.xlane.f32.xlu0 %v1069
        %v1111 = vpop.xlane.xlu0 %1110
        %1112 = vadd.xlane.f32.xlu0 %v1071
        %v1113 = vpop.xlane.xlu0 %1112
        %1114 = vadd.xlane.f32.xlu0 %v1073
        %v1115 = vpop.xlane.xlu0 %1114
        %1116 = vadd.xlane.f32.xlu0 %v1075
        %v1117 = vpop.xlane.xlu0 %1116
        %1118 = vadd.xlane.f32.xlu0 %v1077
        %v1119 = vpop.xlane.xlu0 %1118
        %1120 = vadd.xlane.f32.xlu0 %v1079
        %v1121 = vpop.xlane.xlu0 %1120
        %1122 = vadd.xlane.f32.xlu0 %v1081
        %v1123 = vpop.xlane.xlu0 %1122
        %1124 = vadd.xlane.f32.xlu0 %v1083
        %v1125 = vpop.xlane.xlu0 %1124
        %1126 = vadd.xlane.f32.xlu0 %v1085
        %v1127 = vpop.xlane.xlu0 %1126
        %1128 = vadd.xlane.f32.xlu0 %v1087
        %v1129 = vpop.xlane.xlu0 %1128
        %v1130 = vlog2.pop %v1089
        %v1131 = vmul.f32 %v1130, 0.6931472
        %v1132 = vlog2.pop %v1091
        %v1133 = vmul.f32 %v1132, 0.6931472
        %v1134 = vlog2.pop %v1093
        %v1135 = vmul.f32 %v1134, 0.6931472
        %v1136 = vlog2.pop %v1095
        %v1137 = vmul.f32 %v1136, 0.6931472
        %v1138 = vlog2.pop %v1097
        %v1139 = vmul.f32 %v1138, 0.6931472
        %v1140 = vlog2.pop %v1099
        %v1141 = vmul.f32 %v1140, 0.6931472
        %v1142 = vlog2.pop %v1101
        %v1143 = vmul.f32 %v1142, 0.6931472
        %v1144 = vlog2.pop %v1103
        %v1145 = vmul.f32 %v1144, 0.6931472
        %v1146 = vlog2.pop %v1105
        %v1147 = vmul.f32 %v1146, 0.6931472
        %v1148 = vlog2.pop %v1107
        %v1149 = vmul.f32 %v1148, 0.6931472
        %v1150 = vlog2.pop %v1109
        %v1151 = vmul.f32 %v1150, 0.6931472
        %v1152 = vlog2.pop %v1111
        %v1153 = vmul.f32 %v1152, 0.6931472
        %v1154 = vlog2.pop %v1113
        %v1155 = vmul.f32 %v1154, 0.6931472
        %v1156 = vlog2.pop %v1115
        %v1157 = vmul.f32 %v1156, 0.6931472
        %v1158 = vlog2.pop %v1117
        %v1159 = vmul.f32 %v1158, 0.6931472
        %v1160 = vlog2.pop %v1119
        %v1161 = vmul.f32 %v1160, 0.6931472
        %v1162 = vlog2.pop %v1121
        %v1163 = vmul.f32 %v1162, 0.6931472
        %v1164 = vlog2.pop %v1123
        %v1165 = vmul.f32 %v1164, 0.6931472
        %v1166 = vlog2.pop %v1125
        %v1167 = vmul.f32 %v1166, 0.6931472
        %v1168 = vlog2.pop %v1127
        %v1169 = vmul.f32 %v1168, 0.6931472
        %v1170 = vlog2.pop %v1129
        %v1171 = vmul.f32 %v1170, 0.6931472
        %v1172 = vsub.f32 %v1025, %v1131
        %v1173 = vsub.f32 %v1026, %v1133
        %v1174 = vsub.f32 %v1027, %v1135
        %v1175 = vsub.f32 %v1028, %v1137
        %v1176 = vsub.f32 %v1029, %v1139
        %v1177 = vsub.f32 %v1030, %v1141
        %v1178 = vsub.f32 %v1031, %v1143
        %v1179 = vsub.f32 %v1032, %v1145
        %v1180 = vsub.f32 %v1033, %v1147
        %v1181 = vsub.f32 %v1034, %v1149
        %v1182 = vsub.f32 %v1035, %v1151
        %v1183 = vsub.f32 %v1036, %v1153
        %v1184 = vsub.f32 %v1037, %v1155
        %v1185 = vsub.f32 %v1038, %v1157
        %v1186 = vsub.f32 %v1039, %v1159
        %v1187 = vsub.f32 %v1040, %v1161
        %v1188 = vsub.f32 %v1041, %v1163
        %v1189 = vsub.f32 %v1042, %v1165
        %v1190 = vsub.f32 %v1043, %v1167
        %v1191 = vsub.f32 %v1044, %v1169
        %v1192 = vsub.f32 %v1045, %v1171
        %v1193 = vrcp.pop %v1089
        %v1194 = vrcp.pop %v1091
        %v1195 = vrcp.pop %v1093
        %v1196 = vrcp.pop %v1095
        %v1197 = vrcp.pop %v1097
        %v1198 = vrcp.pop %v1099
        %v1199 = vrcp.pop %v1101
        %v1200 = vrcp.pop %v1103
        %v1201 = vrcp.pop %v1105
        %v1202 = vrcp.pop %v1107
        %v1203 = vrcp.pop %v1109
        %v1204 = vrcp.pop %v1111
        %v1205 = vrcp.pop %v1113
        %v1206 = vrcp.pop %v1115
        %v1207 = vrcp.pop %v1117
        %v1208 = vrcp.pop %v1119
        %v1209 = vrcp.pop %v1121
        %v1210 = vrcp.pop %v1123
        %v1211 = vrcp.pop %v1125
        %v1212 = vrcp.pop %v1127
        %v1213 = vrcp.pop %v1129
        %v1214 = vmul.f32 %v1047, %v1193
        %v1215 = vmul.f32 %v1049, %v1194
        %v1216 = vmul.f32 %v1051, %v1195
        %v1217 = vmul.f32 %v1053, %v1196
        %v1218 = vmul.f32 %v1055, %v1197
        %v1219 = vmul.f32 %v1057, %v1198
        %v1220 = vmul.f32 %v1059, %v1199
        %v1221 = vmul.f32 %v1061, %v1200
        %v1222 = vmul.f32 %v1063, %v1201
        %v1223 = vmul.f32 %v1065, %v1202
        %v1224 = vmul.f32 %v1067, %v1203
        %v1225 = vmul.f32 %v1069, %v1204
        %v1226 = vmul.f32 %v1071, %v1205
        %v1227 = vmul.f32 %v1073, %v1206
        %v1228 = vmul.f32 %v1075, %v1207
        %v1229 = vmul.f32 %v1077, %v1208
        %v1230 = vmul.f32 %v1079, %v1209
        %v1231 = vmul.f32 %v1081, %v1210
        %v1232 = vmul.f32 %v1083, %v1211
        %v1233 = vmul.f32 %v1085, %v1212
        %v1234 = vmul.f32 %v1087, %v1213
        %v1235 = vsub.f32 %v1172, %v962
        %v1236 = vsub.f32 %v1173, %v963
        %v1237 = vsub.f32 %v1174, %v964
        %v1238 = vsub.f32 %v1175, %v965
        %v1239 = vsub.f32 %v1176, %v966
        %v1240 = vsub.f32 %v1177, %v967
        %v1241 = vsub.f32 %v1178, %v968
        %v1242 = vsub.f32 %v1179, %v969
        %v1243 = vsub.f32 %v1180, %v970
        %v1244 = vsub.f32 %v1181, %v971
        %v1245 = vsub.f32 %v1182, %v972
        %v1246 = vsub.f32 %v1183, %v973
        %v1247 = vsub.f32 %v1184, %v974
        %v1248 = vsub.f32 %v1185, %v975
        %v1249 = vsub.f32 %v1186, %v976
        %v1250 = vsub.f32 %v1187, %v977
        %v1251 = vsub.f32 %v1188, %v978
        %v1252 = vsub.f32 %v1189, %v979
        %v1253 = vsub.f32 %v1190, %v980
        %v1254 = vsub.f32 %v1191, %v981
        %v1255 = vsub.f32 %v1192, %v982
        %v1256 = vmul.f32 %v1214, %v1235
        %v1257 = vmul.f32 %v1215, %v1236
        %v1258 = vmul.f32 %v1216, %v1237
        %v1259 = vmul.f32 %v1217, %v1238
        %v1260 = vmul.f32 %v1218, %v1239
        %v1261 = vmul.f32 %v1219, %v1240
        %v1262 = vmul.f32 %v1220, %v1241
        %v1263 = vmul.f32 %v1221, %v1242
        %v1264 = vmul.f32 %v1222, %v1243
        %v1265 = vmul.f32 %v1223, %v1244
        %v1266 = vmul.f32 %v1224, %v1245
        %v1267 = vmul.f32 %v1225, %v1246
        %v1268 = vmul.f32 %v1226, %v1247
        %v1269 = vmul.f32 %v1227, %v1248
        %v1270 = vmul.f32 %v1228, %v1249
        %v1271 = vmul.f32 %v1229, %v1250
        %v1272 = vmul.f32 %v1230, %v1251
        %v1273 = vmul.f32 %v1231, %v1252
        %v1274 = vmul.f32 %v1232, %v1253
        %v1275 = vmul.f32 %v1233, %v1254
        %v1276 = vmul.f32 %v1234, %v1255
        %v1277 = vlaneseq
        %v1278 = vshrl.u32 %v1277, 7
        %v1279 = vadd.s32 %v1278, 8
        %v1280 = vadd.s32 %v1278, 16
        %v1281 = vadd.s32 %v1278, 24
        %v1282 = vadd.s32 %v1278, 32
        %v1283 = vadd.s32 %v1278, 40
        %v1284 = vadd.s32 %v1278, 48
        %vm1285 = vcmp.lt.s32.totalorder %v1278, 49
        %vm1286 = vcmp.lt.s32.totalorder %v1279, 49
        %vm1287 = vcmp.lt.s32.totalorder %v1280, 49
        %vm1288 = vcmp.lt.s32.totalorder %v1281, 49
        %vm1289 = vcmp.lt.s32.totalorder %v1282, 49
        %vm1290 = vcmp.lt.s32.totalorder %v1283, 49
        %vm1291 = vcmp.lt.s32.totalorder %v1284, 49
        %v1292 = vsel %vm1285, 1, 0
        %v1293 = vsel %vm1286, 1, 0
        %v1294 = vsel %vm1287, 1, 0
        %v1295 = vsel %vm1288, 1, 0
        %v1296 = vsel %vm1289, 1, 0
        %v1297 = vsel %vm1290, 1, 0
        %v1298 = vsel %vm1291, 1, 0
        %vm1299 = vcmp.eq.s32.totalorder %v1292, 1
        %vm1300 = vcmp.eq.s32.totalorder %v1293, 1
        %vm1301 = vcmp.eq.s32.totalorder %v1294, 1
        %vm1302 = vcmp.eq.s32.totalorder %v1295, 1
        %vm1303 = vcmp.eq.s32.totalorder %v1296, 1
        %vm1304 = vcmp.eq.s32.totalorder %v1297, 1
        %vm1305 = vcmp.eq.s32.totalorder %v1298, 1
        %v1306 = vsel %vm1299, %v1256, 0.0
        %v1307 = vsel %vm1300, %v1257, 0.0
        %v1308 = vsel %vm1301, %v1258, 0.0
        %v1309 = vsel %vm1302, %v1259, 0.0
        %v1310 = vsel %vm1303, %v1260, 0.0
        %v1311 = vsel %vm1304, %v1261, 0.0
        %v1312 = vsel %vm1305, %v1262, 0.0
        %v1313 = vsel %vm1299, %v1263, 0.0
        %v1314 = vsel %vm1300, %v1264, 0.0
        %v1315 = vsel %vm1301, %v1265, 0.0
        %v1316 = vsel %vm1302, %v1266, 0.0
        %v1317 = vsel %vm1303, %v1267, 0.0
        %v1318 = vsel %vm1304, %v1268, 0.0
        %v1319 = vsel %vm1305, %v1269, 0.0
        %v1320 = vsel %vm1299, %v1270, 0.0
        %v1321 = vsel %vm1300, %v1271, 0.0
        %v1322 = vsel %vm1301, %v1272, 0.0
        %v1323 = vsel %vm1302, %v1273, 0.0
        %v1324 = vsel %vm1303, %v1274, 0.0
        %v1325 = vsel %vm1304, %v1275, 0.0
        %v1326 = vsel %vm1305, %v1276, 0.0
        %v1327 = vadd.f32 %v1306, %v1307
        %v1328 = vadd.f32 %v1327, %v1308
        %v1329 = vadd.f32 %v1328, %v1309
        %v1330 = vadd.f32 %v1329, %v1310
        %v1331 = vadd.f32 %v1330, %v1311
        %v1332 = vadd.f32 %v1331, %v1312
        %v1333 = vrot.slane %v1332, 4
        %v1334 = vadd.f32 %v1332, %v1333
        %v1335 = vrot.slane %v1334, 2
        %v1336 = vadd.f32 %v1334, %v1335
        %v1337 = vrot.slane %v1336, 1
        %v1338 = vadd.f32 %v1336, %v1337
        %v1339 = vadd.f32 %v1313, %v1314
        %v1340 = vadd.f32 %v1339, %v1315
        %v1341 = vadd.f32 %v1340, %v1316
        %v1342 = vadd.f32 %v1341, %v1317
        %v1343 = vadd.f32 %v1342, %v1318
        %v1344 = vadd.f32 %v1343, %v1319
        %v1345 = vrot.slane %v1344, 4
        %v1346 = vadd.f32 %v1344, %v1345
        %v1347 = vrot.slane %v1346, 2
        %v1348 = vadd.f32 %v1346, %v1347
        %v1349 = vrot.slane %v1348, 1
        %v1350 = vadd.f32 %v1348, %v1349
        %v1351 = vadd.f32 %v1320, %v1321
        %v1352 = vadd.f32 %v1351, %v1322
        %v1353 = vadd.f32 %v1352, %v1323
        %v1354 = vadd.f32 %v1353, %v1324
        %v1355 = vadd.f32 %v1354, %v1325
        %v1356 = vadd.f32 %v1355, %v1326
        %v1357 = vrot.slane %v1356, 4
        %v1358 = vadd.f32 %v1356, %v1357
        %v1359 = vrot.slane %v1358, 2
        %v1360 = vadd.f32 %v1358, %v1359
        %v1361 = vrot.slane %v1360, 1
        %v1362 = vadd.f32 %v1360, %v1361
        %1363 = vst [vmem:[%s363] sm:$0x1] %v1338
        %1364 = vst [vmem:[%s363 + $0x1] sm:$0x1] %v1350
        %1365 = vst [vmem:[%s363 + $0x2] sm:$0x1] %v1362
        %v1366 = vld [vmem:[%s393] sm:$0x1]
        %v1367 = vld [vmem:[%s393 + $0x1] sm:$0x1]
        %v1368 = vld [vmem:[%s393 + $0x2] sm:$0x1]
        %vm1369 = vcmask 1040384
        %v1370 = vsel %vm1369, %v1366, -inf
        %1371 = vmax.xlane.f32.xlu0 %v1370
        %v1372 = vpop.xlane.xlu0 %1371
        %v1373 = vsel %vm1369, %v1367, -inf
        %1374 = vmax.xlane.f32.xlu0 %v1373
        %v1375 = vpop.xlane.xlu0 %1374
        %v1376 = vsel %vm1369, %v1368, -inf
        %1377 = vmax.xlane.f32.xlu0 %v1376
        %v1378 = vpop.xlane.xlu0 %1377
        %v1379 = vsub.f32 %v1366, %v1372
        %v1380 = vsub.f32 %v1367, %v1375
        %v1381 = vsub.f32 %v1368, %v1378
        %v1382 = vmul.f32 %v1379, 1.442695
        %v1383 = vpow.pop %v1382
        %v1384 = vmul.f32 %v1380, 1.442695
        %v1385 = vpow.pop %v1384
        %v1386 = vmul.f32 %v1381, 1.442695
        %v1387 = vpow.pop %v1386
        %v1388 = vsel %vm1369, %v1383, 0.0
        %1389 = vadd.xlane.f32.xlu0 %v1388
        %v1390 = vpop.xlane.xlu0 %1389
        %v1391 = vsel %vm1369, %v1385, 0.0
        %1392 = vadd.xlane.f32.xlu0 %v1391
        %v1393 = vpop.xlane.xlu0 %1392
        %v1394 = vsel %vm1369, %v1387, 0.0
        %1395 = vadd.xlane.f32.xlu0 %v1394
        %v1396 = vpop.xlane.xlu0 %1395
        %v1397 = vlog2.pop %v1390
        %v1398 = vmul.f32 %v1397, 0.6931472
        %v1399 = vlog2.pop %v1393
        %v1400 = vmul.f32 %v1399, 0.6931472
        %v1401 = vlog2.pop %v1396
        %v1402 = vmul.f32 %v1401, 0.6931472
        %v1403 = vsub.f32 %v1379, %v1398
        %v1404 = vsub.f32 %v1380, %v1400
        %v1405 = vsub.f32 %v1381, %v1402
        %1406 = vmax.xlane.f32.xlu0 %v704
        %v1407 = vpop.xlane.xlu0 %1406
        %1408 = vmax.xlane.f32.xlu0 %v705
        %v1409 = vpop.xlane.xlu0 %1408
        %1410 = vmax.xlane.f32.xlu0 %v706
        %v1411 = vpop.xlane.xlu0 %1410
        %v1412 = vsub.f32 %v704, %v1407
        %v1413 = vsub.f32 %v705, %v1409
        %v1414 = vsub.f32 %v706, %v1411
        %v1415 = vmul.f32 %v1412, 1.442695
        %v1416 = vpow.pop %v1415
        %v1417 = vmul.f32 %v1413, 1.442695
        %v1418 = vpow.pop %v1417
        %v1419 = vmul.f32 %v1414, 1.442695
        %v1420 = vpow.pop %v1419
        %1421 = vadd.xlane.f32.xlu0 %v1416
        %v1422 = vpop.xlane.xlu0 %1421
        %1423 = vadd.xlane.f32.xlu0 %v1418
        %v1424 = vpop.xlane.xlu0 %1423
        %1425 = vadd.xlane.f32.xlu0 %v1420
        %v1426 = vpop.xlane.xlu0 %1425
        %v1427 = vlog2.pop %v1422
        %v1428 = vmul.f32 %v1427, 0.6931472
        %v1429 = vlog2.pop %v1424
        %v1430 = vmul.f32 %v1429, 0.6931472
        %v1431 = vlog2.pop %v1426
        %v1432 = vmul.f32 %v1431, 0.6931472
        %v1433 = vsub.f32 %v1412, %v1428
        %v1434 = vsub.f32 %v1413, %v1430
        %v1435 = vsub.f32 %v1414, %v1432
        %v1436 = vrcp.pop %v1422
        %v1437 = vrcp.pop %v1424
        %v1438 = vrcp.pop %v1426
        %v1439 = vmul.f32 %v1416, %v1436
        %v1440 = vmul.f32 %v1418, %v1437
        %v1441 = vmul.f32 %v1420, %v1438
        %v1442 = vsub.f32 %v1433, %v1403
        %v1443 = vsub.f32 %v1434, %v1404
        %v1444 = vsub.f32 %v1435, %v1405
        %v1445 = vmul.f32 %v1439, %v1442
        %v1446 = vmul.f32 %v1440, %v1443
        %v1447 = vmul.f32 %v1441, %v1444
        %1448 = vst [vmem:[%s370] sm:$0x1] %v1445
        %1449 = vst [vmem:[%s370 + $0x1] sm:$0x1] %v1446
        %1450 = vst [vmem:[%s370 + $0x2] sm:$0x1] %v1447
        %v1451 = vld [vmem:[%s398] sm:$0x1]
        %v1452 = vld [vmem:[%s398 + $0x1] sm:$0x1]
        %v1453 = vld [vmem:[%s398 + $0x2] sm:$0x1]
        %v1454 = vsel %vm1369, %v1451, -inf
        %1455 = vmax.xlane.f32.xlu0 %v1454
        %v1456 = vpop.xlane.xlu0 %1455
        %v1457 = vsel %vm1369, %v1452, -inf
        %1458 = vmax.xlane.f32.xlu0 %v1457
        %v1459 = vpop.xlane.xlu0 %1458
        %v1460 = vsel %vm1369, %v1453, -inf
        %1461 = vmax.xlane.f32.xlu0 %v1460
        %v1462 = vpop.xlane.xlu0 %1461
        %v1463 = vsub.f32 %v1451, %v1456
        %v1464 = vsub.f32 %v1452, %v1459
        %v1465 = vsub.f32 %v1453, %v1462
        %v1466 = vmul.f32 %v1463, 1.442695
        %v1467 = vpow.pop %v1466
        %v1468 = vmul.f32 %v1464, 1.442695
        %v1469 = vpow.pop %v1468
        %v1470 = vmul.f32 %v1465, 1.442695
        %v1471 = vpow.pop %v1470
        %v1472 = vsel %vm1369, %v1467, 0.0
        %1473 = vadd.xlane.f32.xlu0 %v1472
        %v1474 = vpop.xlane.xlu0 %1473
        %v1475 = vsel %vm1369, %v1469, 0.0
        %1476 = vadd.xlane.f32.xlu0 %v1475
        %v1477 = vpop.xlane.xlu0 %1476
        %v1478 = vsel %vm1369, %v1471, 0.0
        %1479 = vadd.xlane.f32.xlu0 %v1478
        %v1480 = vpop.xlane.xlu0 %1479
        %v1481 = vlog2.pop %v1474
        %v1482 = vmul.f32 %v1481, 0.6931472
        %v1483 = vlog2.pop %v1477
        %v1484 = vmul.f32 %v1483, 0.6931472
        %v1485 = vlog2.pop %v1480
        %v1486 = vmul.f32 %v1485, 0.6931472
        %v1487 = vadd.f32 %v1482, %v1456
        %v1488 = vadd.f32 %v1484, %v1459
        %v1489 = vadd.f32 %v1486, %v1462
        %v1490 = vld [vmem:[%s403] sm:$0x1]
        %v1491 = vld [vmem:[%s403 + $0x1] sm:$0x1]
        %v1492 = vld [vmem:[%s403 + $0x2] sm:$0x1]
        %v1493 = vlaneseq
        %v1494 = vand.u32 %v1493, 127
        %1495 = vset.pattern.permute.xlu0 0
        %1496 = vperm.xlu0 %1495, %v1490
        %v1497 = vpop.permute.xlu0 %1496
        %v1498 = vlaneseq
        %v1499 = vshrl.u32 %v1498, 7
        %v1500 = vsub.s32 0, %v1499
        %v1501 = vrot.slane %v1497, %v1500
        %1502 = vset.pattern.permute.xlu0 0
        %1503 = vperm.xlu0 %1502, %v1491
        %v1504 = vpop.permute.xlu0 %1503
        %v1505 = vlaneseq
        %v1506 = vshrl.u32 %v1505, 7
        %v1507 = vsub.s32 0, %v1506
        %v1508 = vrot.slane %v1504, %v1507
        %1509 = vset.pattern.permute.xlu0 0
        %1510 = vperm.xlu0 %1509, %v1492
        %v1511 = vpop.permute.xlu0 %1510
        %v1512 = vlaneseq
        %v1513 = vshrl.u32 %v1512, 7
        %v1514 = vsub.s32 0, %v1513
        %v1515 = vrot.slane %v1511, %v1514
        %vm1516 = vcmp.eq.s32.totalorder %v1494, %v1501
        %vm1517 = vcmp.eq.s32.totalorder %v1494, %v1508
        %vm1518 = vcmp.eq.s32.totalorder %v1494, %v1515
        %v1519 = vsel %vm1516, %v1451, 0.0
        %v1520 = vsel %vm1517, %v1452, 0.0
        %v1521 = vsel %vm1518, %v1453, 0.0
        %v1522 = vsel %vm1369, %v1519, 0.0
        %1523 = vadd.xlane.f32.xlu0 %v1522
        %v1524 = vpop.xlane.xlu0 %1523
        %v1525 = vsel %vm1369, %v1520, 0.0
        %1526 = vadd.xlane.f32.xlu0 %v1525
        %v1527 = vpop.xlane.xlu0 %1526
        %v1528 = vsel %vm1369, %v1521, 0.0
        %1529 = vadd.xlane.f32.xlu0 %v1528
        %v1530 = vpop.xlane.xlu0 %1529
        %v1531 = vsub.f32 %v1487, %v1524
        %v1532 = vsub.f32 %v1488, %v1527
        %v1533 = vsub.f32 %v1489, %v1530
        %vm1534 = vcmask 0
        %1535 = vst.msk [vmem:[%s410] sm:$0x1] %vm1534, %v1531
        %1536 = vst.msk [vmem:[%s410 + $0x1] sm:$0x1] %vm1534, %v1532
        %1537 = vst.msk [vmem:[%s410 + $0x2] sm:$0x1] %vm1534, %v1533
        %s1538 = sand.u32 %s185, 1
        %s1539 = scalar_lea.sflag [#allocation3], %s1538
        %s1540 = sand.u32 %s185, 1
        %s1541 = smul.addr %s1540, 3
        %s1542 = scalar_lea.vmem [#allocation2], %s1541
        %s1543 = sand.u32 %s211, 1
        %s1544 = scalar_lea.sflag [#allocation5], %s1543
        %s1545 = sand.u32 %s211, 1
        %s1546 = smul.addr %s1545, 3
        %s1547 = scalar_lea.vmem [#allocation4], %s1546
        %s1548 = smul.u32 3, %s26
        %p1549 = scmp.lt.s32.totalorder %s1548, 5
        %s1550 = scalar_select %p1549, %s1548, 5
        %s1551 = scalar_lea.vmem %s8, %s1550
        // Predicated region
        $region45: #{tpu_custom_call.1} parent=43 // pred_check
          %p1552 = pneg %p195
        $region46: #{tpu_custom_call.1} parent=43 // pred_check_branch
          %1554 = sbr.rel (%p1552) target = $region48
        $region47: #{tpu_custom_call.1} parent=43 // pred_region
          %s1555 = smul.u32 3, %s26
          %s1557 = ssub.s32 48, 48
          %1558 = vsyncadd %s1539, %s1557
          %s1559 = smul.addr %s1555, 16
          %s1560 = scalar_lea.hbm %s6, %s1559
          %s1561 = sshll.u32 %s1542, 4
          %s1562 = int_to_ptr.vmem [resolvable:$true] %s1561
          %1567 = dma.vmem_to_hbm [thread:$0]  %s1562, 48, %s1560, %s1539, 16, 16, 1
        $region48: #{tpu_custom_call.1} parent=43 // pred_fallthru
          _
        // Predicated region
        $region49: #{tpu_custom_call.1} parent=43 // pred_check
          %p1568 = pneg %p221
        $region50: #{tpu_custom_call.1} parent=43 // pred_check_branch
          %1570 = sbr.rel (%p1568) target = $region52
        $region51: #{tpu_custom_call.1} parent=43 // pred_region
          %s1571 = smul.u32 3, %s26
          %s1573 = ssub.s32 48, 48
          %1574 = vsyncadd %s1544, %s1573
          %s1575 = smul.addr %s1571, 16
          %s1576 = scalar_lea.hbm %s7, %s1575
          %s1577 = sshll.u32 %s1547, 4
          %s1578 = int_to_ptr.vmem [resolvable:$true] %s1577
          %1583 = dma.vmem_to_hbm [thread:$0]  %s1578, 48, %s1576, %s1544, 16, 16, 1
        $region52: #{tpu_custom_call.1} parent=43 // pred_fallthru
          _
        // Predicated region
        $region53: #{tpu_custom_call.1} parent=43 // pred_check
          %p1584 = pneg %p247
        $region54: #{tpu_custom_call.1} parent=43 // pred_check_branch
          %1586 = sbr.rel (%p1584) target = $region56
        $region55: #{tpu_custom_call.1} parent=43 // pred_region
          %s1587 = smul.u32 3, %s26
        $region56: #{tpu_custom_call.1} parent=43 // pred_fallthru
          _
      $region44: #{tpu_custom_call.1} parent=5 // pred_fallthru
        _
      %p1588 = scmp.le.s32.totalorder 2, %s21
      // Predicated region
      $region57: #{tpu_custom_call.1} parent=5 // pred_check
        %p1589 = pneg %p1588
      $region58: #{tpu_custom_call.1} parent=5 // pred_check_branch
        %1591 = sbr.rel (%p1589) target = $region60
      $region59: #{tpu_custom_call.1} parent=5 // pred_region
        %s1592 = ssub.s32 %s21, 2
        // Predicated region
        $region61: #{tpu_custom_call.1} parent=59 // pred_check
          %p1593 = pneg %p201
        $region62: #{tpu_custom_call.1} parent=59 // pred_check_branch
          %1595 = sbr.rel (%p1593) target = $region64
        $region63: #{tpu_custom_call.1} parent=59 // pred_region
          %s1596 = sand.u32 %s186, 1
          %s1597 = scalar_lea.sflag [#allocation3], %s1596
          %s1598 = sand.u32 %s186, 1
          %s1599 = smul.addr %s1598, 3
          %s1600 = scalar_lea.vmem [#allocation2], %s1599
          %1601 = dma.done %s1597, 48
        $region64: #{tpu_custom_call.1} parent=59 // pred_fallthru
          _
        // Predicated region
        $region65: #{tpu_custom_call.1} parent=59 // pred_check
          %p1602 = pneg %p227
        $region66: #{tpu_custom_call.1} parent=59 // pred_check_branch
          %1604 = sbr.rel (%p1602) target = $region68
        $region67: #{tpu_custom_call.1} parent=59 // pred_region
          %s1605 = sand.u32 %s212, 1
          %s1606 = scalar_lea.sflag [#allocation5], %s1605
          %s1607 = sand.u32 %s212, 1
          %s1608 = smul.addr %s1607, 3
          %s1609 = scalar_lea.vmem [#allocation4], %s1608
          %1610 = dma.done %s1606, 48
        $region68: #{tpu_custom_call.1} parent=59 // pred_fallthru
          _
        // Predicated region
        $region69: #{tpu_custom_call.1} parent=59 // pred_check
          %p1611 = pneg %p253
        $region70: #{tpu_custom_call.1} parent=59 // pred_check_branch
          %1613 = sbr.rel (%p1611) target = $region72
        $region71: #{tpu_custom_call.1} parent=59 // pred_region
          %s1614 = smul.u32 3, %s27
          %p1615 = scmp.lt.s32.totalorder %s1614, 5
          %s1616 = scalar_select %p1615, %s1614, 5
          %s1617 = scalar_lea.vmem %s8, %s1616
        $region72: #{tpu_custom_call.1} parent=59 // pred_fallthru
          _
      $region60: #{tpu_custom_call.1} parent=5 // pred_fallthru
        _
    $region6: #{tpu_custom_call.1} parent=1 // loop_footer
      %s25 = sadd.s32 1, %s21
    $region7: #{tpu_custom_call.1} parent=1 // loop_footer_branch
      %20 = sbr.rel target = $region3
    $region8: #{tpu_custom_call.1} parent=1 // loop_exit
      _
    %1618 = vsyncpa [#allocation3], 1
    %s1619 = scalar_lea.sflag [#allocation3], 1
    %1620 = vsyncpa %s1619, 1
    %1621 = vsyncpa [#allocation5], 1
    %s1622 = scalar_lea.sflag [#allocation5], 1
    %1623 = vsyncpa %s1622, 1

</llo_original>
